<compile_context>
chip_gen: v5e
topology: v5e:2x2
jax: 0.10.0
libtpu: 0.0.40
codegen_flags: <defaults>
</compile_context>

<pallas_src>
import functools

import jax
import jax.numpy as jnp
from jax.experimental import pallas as pl
from jax.experimental.pallas import tpu as pltpu

HIDDEN = 512   # hidden width of the first Linear (fixed by the PyTorch module)
LANES = 128    # TPU lane width; packed input / fused output slab width


def _round_up(a, m):
    return (a + m - 1) // m * m


def encoder_kernel(xin_ref, w1_ref, b1_ref, wh_ref, bh_ref, wv_ref, bv_ref,
                   out_ref, *, z_dim):
    # xin lanes: [0, x_dim) = x, [2*z_dim, 3*z_dim) = eps, all other lanes zero.
    xin = xin_ref[...]                                            # bf16 [tile_b, 128]

    # ---- Linear(x_dim, 512) + ReLU.  W1 is zero-padded to 128 input rows, so the
    # eps / padding lanes contribute nothing to h1.  f32 accumulate + elementwise.
    h1 = jnp.dot(xin, w1_ref[...], preferred_element_type=jnp.float32) + b1_ref[...]
    h1 = jnp.maximum(h1, 0.0)
    h1b = h1.astype(jnp.bfloat16)

    # ---- Fused heads: two lane-dense [512, 128] matmuls (MXU has slack).
    #   head lanes: [ mu | logvar | mu | logvar ]   (period 2*z_dim)
    #   lv   lanes: [ logvar | logvar | logvar | logvar ]
    head = jnp.dot(h1b, wh_ref[...], preferred_element_type=jnp.float32) + bh_ref[...]
    lv = jnp.dot(h1b, wv_ref[...], preferred_element_type=jnp.float32) + bv_ref[...]

    lane = jax.lax.broadcasted_iota(jnp.int32, head.shape, dimension=1)
    z_lanes = (lane >= 2 * z_dim) & (lane < 3 * z_dim)

    # Mask BEFORE exp so non-z lanes can never produce inf/NaN.
    safe_logvar = jnp.where(z_lanes, lv, 0.0)
    eps = xin.astype(jnp.float32)            # eps already sits under the z lanes
    noise = jnp.where(z_lanes, eps * jnp.exp(0.5 * safe_logvar), 0.0)

    # Output slab: [0,z)=mu, [z,2z)=logvar, [2z,3z)=z, [3z,4z)=harmless copies.
    out_ref[...] = (head + noise).astype(out_ref.dtype)


def init_params(key, x_dim, hidden, z_dim):
    """Deterministic synthetic parameters (shapes match the PyTorch module,
    stored pre-transposed as [in, out])."""
    k1, k2, k3, k4, k5, k6 = jax.random.split(key, 6)
    s1 = 1.0 / jnp.sqrt(x_dim)
    s2 = 1.0 / jnp.sqrt(hidden)
    return {
        "w1":   jax.random.uniform(k1, (x_dim, hidden), jnp.float32, -s1, s1),
        "b1":   jax.random.uniform(k2, (1, hidden),     jnp.float32, -s1, s1),
        "wmu":  jax.random.uniform(k3, (hidden, z_dim), jnp.float32, -s2, s2),
        "bmu":  jax.random.uniform(k4, (1, z_dim),      jnp.float32, -s2, s2),
        "wvar": jax.random.uniform(k5, (hidden, z_dim), jnp.float32, -s2, s2),
        "bvar": jax.random.uniform(k6, (1, z_dim),      jnp.float32, -s2, s2),
    }


def pack_params(params):
    """One-time packing of kernel-ready parameters (bf16 MXU weights, zero-padded
    W1, fused lane-dense head weights/biases)."""
    x_dim, hidden = params["w1"].shape
    z_dim = params["wmu"].shape[1]
    assert hidden == HIDDEN
    assert LANES % (2 * z_dim) == 0, "head packing requires 2*z_dim to divide 128"
    assert 3 * z_dim <= LANES, "output slab needs mu|logvar|z to fit in 128 lanes"
    assert x_dim <= 2 * z_dim, "x||eps packing needs x lanes clear of the eps window"
    reps = LANES // (2 * z_dim)

    # W1 padded to 128 input rows; rows >= x_dim (the eps / zero lanes) are zero.
    w1p = jnp.zeros((LANES, HIDDEN), jnp.float32).at[:x_dim].set(params["w1"])

    w_pair = jnp.concatenate([params["wmu"], params["wvar"]], axis=1)
    b_pair = jnp.concatenate([params["bmu"], params["bvar"]], axis=1)
    return {
        "x_dim": x_dim,
        "z_dim": z_dim,
        "w1": w1p.astype(jnp.bfloat16),
        "b1": params["b1"].astype(jnp.float32),
        "wh": jnp.tile(w_pair, (1, reps)).astype(jnp.bfloat16),
        "bh": jnp.tile(b_pair, (1, reps)).astype(jnp.float32),
        "wv": jnp.tile(params["wvar"], (1, LANES // z_dim)).astype(jnp.bfloat16),
        "bv": jnp.tile(params["bvar"], (1, LANES // z_dim)).astype(jnp.float32),
    }


def encoder_forward(x, packed, eps, *, tile_b=None):
    """Fused encoder forward: single bf16 x||eps input slab, resident weights,
    single lane-dense f32 output slab sliced into (z, mu, logvar)."""
    x_dim = packed["x_dim"]
    z_dim = packed["z_dim"]
    B = x.shape[0]

    # Tile sizing: single grid step for small batches (per-step overhead dominates),
    # 512-row tiles + "parallel" batch axis for large batches (v7x: 2 TensorCores).
    if tile_b is None:
        tile_b = _round_up(B, 8) if B <= 1024 else 512
    nb = pl.cdiv(B, tile_b)
    Bp = nb * tile_b

    # Pack x||eps into one bf16 [Bp, 128] slab: x at lanes [0, x_dim), eps at
    # lanes [2z, 3z) (exactly where the kernel's noise computation reads it).
    xin = jnp.zeros((Bp, LANES), jnp.bfloat16)
    xin = xin.at[:B, :x_dim].set(x.astype(jnp.bfloat16))
    xin = xin.at[:B, 2 * z_dim:3 * z_dim].set(eps.astype(jnp.bfloat16))

    kernel = functools.partial(encoder_kernel, z_dim=z_dim)

    grid_spec = pltpu.PrefetchScalarGridSpec(
        num_scalar_prefetch=0,
        grid=(nb,),
        in_specs=[
            pl.BlockSpec((tile_b, LANES), lambda i: (i, 0)),   # x||eps tile (streamed)
            pl.BlockSpec((LANES, HIDDEN), lambda i: (0, 0)),   # W1 (resident)
            pl.BlockSpec((1, HIDDEN),     lambda i: (0, 0)),   # b1 (resident)
            pl.BlockSpec((HIDDEN, LANES), lambda i: (0, 0)),   # head W  [mu|var|mu|var]
            pl.BlockSpec((1, LANES),      lambda i: (0, 0)),   # head b
            pl.BlockSpec((HIDDEN, LANES), lambda i: (0, 0)),   # logvar W (replicated)
            pl.BlockSpec((1, LANES),      lambda i: (0, 0)),   # logvar b
        ],
        out_specs=pl.BlockSpec((tile_b, LANES), lambda i: (i, 0)),
    )

    flops = 2 * Bp * HIDDEN * LANES * 3          # x@W1 (K=128) + two head matmuls
    bytes_accessed = (xin.size * 2
                      + (packed["w1"].size + packed["wh"].size + packed["wv"].size) * 2
                      + (packed["b1"].size + packed["bh"].size + packed["bv"].size) * 4
                      + Bp * LANES * 4)

    out = pl.pallas_call(
        kernel,
        out_shape=jax.ShapeDtypeStruct((Bp, LANES), jnp.float32),
        grid_spec=grid_spec,
        compiler_params=pltpu.CompilerParams(
            dimension_semantics=("parallel",)),   # v7x: shard batch over 2 TCs
        cost_estimate=pl.CostEstimate(
            flops=flops, transcendentals=Bp * LANES,
            bytes_accessed=bytes_accessed),
    )(xin, packed["w1"], packed["b1"], packed["wh"], packed["bh"],
      packed["wv"], packed["bv"])

    mu = out[:B, 0:z_dim]
    logvar = out[:B, z_dim:2 * z_dim]
    z = out[:B, 2 * z_dim:3 * z_dim]
    return z, mu, logvar


def encoder_reference(x, params, eps):
    """Pure-JAX reference mirroring the kernel's numerics (bf16 MXU operands,
    bf16-quantized eps, f32 accumulation and elementwise)."""
    h1 = jnp.dot(x.astype(jnp.bfloat16), params["w1"].astype(jnp.bfloat16),
                 preferred_element_type=jnp.float32) + params["b1"]
    h1 = jnp.maximum(h1, 0.0)
    h1b = h1.astype(jnp.bfloat16)
    mu = jnp.dot(h1b, params["wmu"].astype(jnp.bfloat16),
                 preferred_element_type=jnp.float32) + params["bmu"]
    logvar = jnp.dot(h1b, params["wvar"].astype(jnp.bfloat16),
                     preferred_element_type=jnp.float32) + params["bvar"]
    eps_q = eps.astype(jnp.bfloat16).astype(jnp.float32)   # kernel streams eps as bf16
    z = mu + eps_q * jnp.exp(0.5 * logvar)
    return z, mu, logvar


if __name__ == "__main__":
    B, X_DIM, Z_DIM = 256, 64, 32

    key = jax.random.PRNGKey(0)
    k_params, k_x, k_eps = jax.random.split(key, 3)

    params = init_params(k_params, X_DIM, HIDDEN, Z_DIM)
    packed = pack_params(params)
    x = jax.random.normal(k_x, (B, X_DIM), jnp.float32)
    # torch.randn_like(std) equivalent, drawn deterministically outside the kernel.
    eps = jax.random.normal(k_eps, (B, Z_DIM), jnp.float32)

    z, mu, logvar = encoder_forward(x, packed, eps)
    jax.block_until_ready((z, mu, logvar))

    z_ref, mu_ref, logvar_ref = encoder_reference(x, params, eps)
    assert jnp.allclose(mu, mu_ref, atol=1e-2, rtol=1e-2)
    assert jnp.allclose(logvar, logvar_ref, atol=1e-2, rtol=1e-2)
    assert jnp.allclose(z, z_ref, atol=1e-2, rtol=1e-2)

    print("KERNEL_OK")
</pallas_src>

<mosaic_0001>
module attributes {stable_mosaic.version = 11 : i64} {
  func.func @encoder_kernel(%arg0: i32, %arg1: memref<256x128xbf16, #tpu.memory_space<vmem>>, %arg2: memref<128x512xbf16, #tpu.memory_space<vmem>>, %arg3: memref<1x512xf32, #tpu.memory_space<vmem>>, %arg4: memref<512x128xbf16, #tpu.memory_space<vmem>>, %arg5: memref<1x128xf32, #tpu.memory_space<vmem>>, %arg6: memref<512x128xbf16, #tpu.memory_space<vmem>>, %arg7: memref<1x128xf32, #tpu.memory_space<vmem>>, %arg8: memref<256x128xf32, #tpu.memory_space<vmem>>) attributes {dimension_semantics = [#tpu.dimension_semantics<parallel>], iteration_bounds = array<i64: 1>, scalar_prefetch = 0 : i64, scratch_operands = 0 : i64, tpu.core_type = #tpu.core_type<tc>, window_params = [{transform_indices = @transform_0, window_bounds = array<i64: 256, 128>}, {pipeline_mode = #tpu.pipeline_mode<synchronous>, transform_indices = @transform_1, window_bounds = array<i64: 128, 512>}, {pipeline_mode = #tpu.pipeline_mode<synchronous>, transform_indices = @transform_2, window_bounds = array<i64: 1, 512>}, {pipeline_mode = #tpu.pipeline_mode<synchronous>, transform_indices = @transform_3, window_bounds = array<i64: 512, 128>}, {pipeline_mode = #tpu.pipeline_mode<synchronous>, transform_indices = @transform_4, window_bounds = array<i64: 1, 128>}, {pipeline_mode = #tpu.pipeline_mode<synchronous>, transform_indices = @transform_5, window_bounds = array<i64: 512, 128>}, {pipeline_mode = #tpu.pipeline_mode<synchronous>, transform_indices = @transform_6, window_bounds = array<i64: 1, 128>}, {transform_indices = @transform_7, window_bounds = array<i64: 256, 128>}]} {
    %c0 = arith.constant 0 : index
    %c0_0 = arith.constant 0 : index
    %0 = vector.load %arg1[%c0, %c0_0] : memref<256x128xbf16, #tpu.memory_space<vmem>>, vector<256x128xbf16>
    %c0_1 = arith.constant 0 : index
    %c0_2 = arith.constant 0 : index
    %1 = vector.load %arg2[%c0_1, %c0_2] : memref<128x512xbf16, #tpu.memory_space<vmem>>, vector<128x512xbf16>
    %cst = arith.constant dense<0.000000e+00> : vector<256x512xf32>
    %2 = tpu.matmul %0, %1, %cst {dimension_numbers = #tpu.dot_dimension_numbers<[1], [0], [0], [1], [0, 0, 1, 1], [], []>} : vector<256x128xbf16>, vector<128x512xbf16>, vector<256x512xf32> -> vector<256x512xf32>
    %c0_3 = arith.constant 0 : index
    %c0_4 = arith.constant 0 : index
    %3 = vector.load %arg3[%c0_3, %c0_4] : memref<1x512xf32, #tpu.memory_space<vmem>>, vector<1x512xf32>
    %4 = vector.broadcast %3 : vector<1x512xf32> to vector<256x512xf32>
    %5 = arith.addf %2, %4 : vector<256x512xf32>
    %cst_5 = arith.constant 0.000000e+00 : f32
    %6 = vector.broadcast %cst_5 : f32 to vector<256x512xf32>
    %7 = arith.maximumf %5, %6 : vector<256x512xf32>
    %8 = arith.truncf %7 : vector<256x512xf32> to vector<256x512xbf16>
    %c0_6 = arith.constant 0 : index
    %c0_7 = arith.constant 0 : index
    %9 = vector.load %arg4[%c0_6, %c0_7] : memref<512x128xbf16, #tpu.memory_space<vmem>>, vector<512x128xbf16>
    %cst_8 = arith.constant dense<0.000000e+00> : vector<256x128xf32>
    %10 = tpu.matmul %8, %9, %cst_8 {dimension_numbers = #tpu.dot_dimension_numbers<[1], [0], [0], [1], [0, 0, 1, 1], [], []>} : vector<256x512xbf16>, vector<512x128xbf16>, vector<256x128xf32> -> vector<256x128xf32>
    %c0_9 = arith.constant 0 : index
    %c0_10 = arith.constant 0 : index
    %11 = vector.load %arg5[%c0_9, %c0_10] : memref<1x128xf32, #tpu.memory_space<vmem>>, vector<1x128xf32>
    %12 = vector.broadcast %11 : vector<1x128xf32> to vector<256x128xf32>
    %13 = arith.addf %10, %12 : vector<256x128xf32>
    %c0_11 = arith.constant 0 : index
    %c0_12 = arith.constant 0 : index
    %14 = vector.load %arg6[%c0_11, %c0_12] : memref<512x128xbf16, #tpu.memory_space<vmem>>, vector<512x128xbf16>
    %cst_13 = arith.constant dense<0.000000e+00> : vector<256x128xf32>
    %15 = tpu.matmul %8, %14, %cst_13 {dimension_numbers = #tpu.dot_dimension_numbers<[1], [0], [0], [1], [0, 0, 1, 1], [], []>} : vector<256x512xbf16>, vector<512x128xbf16>, vector<256x128xf32> -> vector<256x128xf32>
    %c0_14 = arith.constant 0 : index
    %c0_15 = arith.constant 0 : index
    %16 = vector.load %arg7[%c0_14, %c0_15] : memref<1x128xf32, #tpu.memory_space<vmem>>, vector<1x128xf32>
    %17 = vector.broadcast %16 : vector<1x128xf32> to vector<256x128xf32>
    %18 = arith.addf %15, %17 : vector<256x128xf32>
    %19 = tpu.iota {dimensions = array<i32: 1>} : vector<256x128xi32>
    %c64_i32 = arith.constant 64 : i32
    %20 = vector.broadcast %c64_i32 : i32 to vector<256x128xi32>
    %21 = arith.cmpi sge, %19, %20 : vector<256x128xi32>
    %c96_i32 = arith.constant 96 : i32
    %22 = vector.broadcast %c96_i32 : i32 to vector<256x128xi32>
    %23 = arith.cmpi slt, %19, %22 : vector<256x128xi32>
    %24 = arith.andi %21, %23 : vector<256x128xi1>
    %cst_16 = arith.constant 0.000000e+00 : f32
    %25 = vector.broadcast %cst_16 : f32 to vector<256x128xf32>
    %26 = arith.select %24, %18, %25 : vector<256x128xi1>, vector<256x128xf32>
    %27 = arith.extf %0 : vector<256x128xbf16> to vector<256x128xf32>
    %cst_17 = arith.constant 5.000000e-01 : f32
    %28 = vector.broadcast %cst_17 : f32 to vector<256x128xf32>
    %29 = arith.mulf %28, %26 : vector<256x128xf32>
    %30 = math.exp %29 : vector<256x128xf32>
    %31 = arith.mulf %27, %30 : vector<256x128xf32>
    %cst_18 = arith.constant 0.000000e+00 : f32
    %32 = vector.broadcast %cst_18 : f32 to vector<256x128xf32>
    %33 = arith.select %24, %31, %32 : vector<256x128xi1>, vector<256x128xf32>
    %34 = arith.addf %13, %33 : vector<256x128xf32>
    %c0_19 = arith.constant 0 : index
    %c0_20 = arith.constant 0 : index
    %35 = vector.load %arg8[%c0_19, %c0_20] : memref<256x128xf32, #tpu.memory_space<vmem>>, vector<256x128xf32>
    tpu.vector_store %arg8[%c0_19, %c0_20], %34 {strides = array<i32>} : memref<256x128xf32, #tpu.memory_space<vmem>>, vector<256x128xf32>,
    return
  }
  func.func @transform_0(%arg0: i32) -> (i32, i32) {
    %c0_i32 = arith.constant 0 : i32
    %c0_i32_0 = arith.constant 0 : i32
    return %arg0, %c0_i32 : i32, i32
  }
  func.func @transform_1(%arg0: i32) -> (i32, i32) {
    %c0_i32 = arith.constant 0 : i32
    %c0_i32_0 = arith.constant 0 : i32
    %c0_i32_1 = arith.constant 0 : i32
    return %c0_i32, %c0_i32_0 : i32, i32
  }
  func.func @transform_2(%arg0: i32) -> (i32, i32) {
    %c0_i32 = arith.constant 0 : i32
    %c0_i32_0 = arith.constant 0 : i32
    %c0_i32_1 = arith.constant 0 : i32
    return %c0_i32, %c0_i32_0 : i32, i32
  }
  func.func @transform_3(%arg0: i32) -> (i32, i32) {
    %c0_i32 = arith.constant 0 : i32
    %c0_i32_0 = arith.constant 0 : i32
    %c0_i32_1 = arith.constant 0 : i32
    return %c0_i32, %c0_i32_0 : i32, i32
  }
  func.func @transform_4(%arg0: i32) -> (i32, i32) {
    %c0_i32 = arith.constant 0 : i32
    %c0_i32_0 = arith.constant 0 : i32
    %c0_i32_1 = arith.constant 0 : i32
    return %c0_i32, %c0_i32_0 : i32, i32
  }
  func.func @transform_5(%arg0: i32) -> (i32, i32) {
    %c0_i32 = arith.constant 0 : i32
    %c0_i32_0 = arith.constant 0 : i32
    %c0_i32_1 = arith.constant 0 : i32
    return %c0_i32, %c0_i32_0 : i32, i32
  }
  func.func @transform_6(%arg0: i32) -> (i32, i32) {
    %c0_i32 = arith.constant 0 : i32
    %c0_i32_0 = arith.constant 0 : i32
    %c0_i32_1 = arith.constant 0 : i32
    return %c0_i32, %c0_i32_0 : i32, i32
  }
  func.func @transform_7(%arg0: i32) -> (i32, i32) {
    %c0_i32 = arith.constant 0 : i32
    %c0_i32_0 = arith.constant 0 : i32
    return %arg0, %c0_i32 : i32, i32
  }
}

</mosaic_0001>

<llo_original>
// kernel: tpu_custom_call.1
$region0: #{tpu_custom_call.1}
  #allocation0 [shape = 'u32[]', space=smem, size = 0x4, offset = 0x4, fixed_abs, tag = 'smem constant byte address 0x4 - core index']
  #allocation1 [shape = 'u32[72,128]{1,0:T(1,128)}', space=vmem, size = 0x9000, scoped, tag = 'internal scratch']
  %s0 = inlined_call_operand.hbm [shape: bf16[256,128], index: 0, kind: input, shape index: {}]
  %s1 = inlined_call_operand.hbm [shape: bf16[128,512], index: 1, kind: input, shape index: {}]
  %s2 = inlined_call_operand.hbm [shape: f32[1,512], index: 2, kind: input, shape index: {}]
  %s3 = inlined_call_operand.hbm [shape: bf16[512,128], index: 3, kind: input, shape index: {}]
  %s4 = inlined_call_operand.vmem [shape: f32[1,128], index: 4, kind: input, shape index: {}]
  %s5 = inlined_call_operand.hbm [shape: bf16[512,128], index: 5, kind: input, shape index: {}]
  %s6 = inlined_call_operand.vmem [shape: f32[1,128], index: 6, kind: input, shape index: {}]
  %s7 = inlined_call_operand.hbm [shape: f32[256,128], index: 7, kind: output, shape index: {}]
  %s8 = sld [smem:[#allocation0]]
  $region58: #{tpu_custom_call.1} parent=0
    _
  %s10 = ssub.s32 1, %s8
  %s11 = scalar_select 0, %s10, %s8
  $region1: #{tpu_custom_call.1} parent=0
    #allocation2 [shape = 'u8[65536]{0}', space=vmem, size = 0x10000, scoped, tag = 'input window, operand 0, single buffered']
    #allocation3 [shape = 's32[1]{0}', space=sflag, size = 0x4, scoped, tag = 'scoped memory for tpu_custom_call.1']
    #allocation4 [shape = 's32[1]{0}', space=sflag, size = 0x4, scoped, tag = 'scoped memory for tpu_custom_call.1']
    #allocation5 [shape = 'u8[131072]{0}', space=vmem, size = 0x20000, scoped, tag = 'input window, operand 1, single buffered']
    #allocation6 [shape = 's32[1]{0}', space=sflag, size = 0x4, scoped, tag = 'scoped memory for tpu_custom_call.1']
    #allocation7 [shape = 'u8[2048]{0}', space=vmem, size = 0x800, scoped, tag = 'input window, operand 2, single buffered']
    #allocation8 [shape = 'u8[131072]{0}', space=vmem, size = 0x20000, scoped, tag = 'input window, operand 3, single buffered']
    #allocation9 [shape = 's32[1]{0}', space=sflag, size = 0x4, scoped, tag = 'scoped memory for tpu_custom_call.1']
    #allocation10 [shape = 'u8[131072]{0}', space=vmem, size = 0x20000, scoped, tag = 'input window, operand 5, single buffered']
    #allocation11 [shape = 'u8[131072]{0}', space=vmem, size = 0x20000, scoped, tag = 'output window, operand 0, single buffered']
    %12 = vsyncpa [#allocation3], 0
    %13 = vsyncpa [#allocation6], 0
    %14 = vsyncpa [#allocation9], 0
    %15 = vsyncpa [#allocation4], 0
    // Predicated region
    $region2: #{tpu_custom_call.1} parent=1 // pred_check
      _
    $region3: #{tpu_custom_call.1} parent=1 // pred_check_branch
      %17 = sbr.rel (0) target = $region5
    $region4: #{tpu_custom_call.1} parent=1 // pred_region
      %19 = vsyncadd [#allocation3], 0
      %s20 = sshll.u32 %s0, 4
      %s21 = int_to_ptr.hbm [resolvable:$true] %s20
      %s22 = sshll.u32 [#allocation2], 4
      %s23 = int_to_ptr.vmem [resolvable:$true] %s22
      %28 = dma.hbm_to_vmem [thread:$0]  %s21, 2048, %s23, [#allocation3], 64, 64, 4
    $region5: #{tpu_custom_call.1} parent=1 // pred_fallthru
      _
    // Predicated region
    $region6: #{tpu_custom_call.1} parent=1 // pred_check
      _
    $region7: #{tpu_custom_call.1} parent=1 // pred_check_branch
      %30 = sbr.rel (0) target = $region9
    $region8: #{tpu_custom_call.1} parent=1 // pred_region
      %32 = vsyncadd [#allocation6], 0
      %s33 = sshll.u32 %s1, 4
      %s34 = int_to_ptr.hbm [resolvable:$true] %s33
      %s35 = sshll.u32 [#allocation5], 4
      %s36 = int_to_ptr.vmem [resolvable:$true] %s35
      %41 = dma.hbm_to_vmem [thread:$0]  %s34, 4096, %s36, [#allocation6], 256, 256, 16
    $region9: #{tpu_custom_call.1} parent=1 // pred_fallthru
      _
    // Predicated region
    $region10: #{tpu_custom_call.1} parent=1 // pred_check
      _
    $region11: #{tpu_custom_call.1} parent=1 // pred_check_branch
      %43 = sbr.rel (0) target = $region13
    $region12: #{tpu_custom_call.1} parent=1 // pred_region
      %45 = vsyncadd [#allocation6], 0
      %s47 = sshll.u32 %s2, 4
      %s48 = int_to_ptr.hbm [resolvable:$true] %s47
      %s49 = sshll.u32 [#allocation7], 4
      %s50 = int_to_ptr.vmem [resolvable:$true] %s49
      %52 = dma.hbm_to_vmem [thread:$0]  %s48, 64, %s50, [#allocation6]
    $region13: #{tpu_custom_call.1} parent=1 // pred_fallthru
      _
    // Predicated region
    $region14: #{tpu_custom_call.1} parent=1 // pred_check
      _
    $region15: #{tpu_custom_call.1} parent=1 // pred_check_branch
      %54 = sbr.rel (0) target = $region17
    $region16: #{tpu_custom_call.1} parent=1 // pred_region
      %56 = vsyncadd [#allocation9], 0
      %s57 = sshll.u32 %s3, 4
      %s58 = int_to_ptr.hbm [resolvable:$true] %s57
      %s59 = sshll.u32 [#allocation8], 4
      %s60 = int_to_ptr.vmem [resolvable:$true] %s59
      %65 = dma.hbm_to_vmem [thread:$0]  %s58, 4096, %s60, [#allocation9], 64, 64, 4
    $region17: #{tpu_custom_call.1} parent=1 // pred_fallthru
      _
    // Predicated region
    $region18: #{tpu_custom_call.1} parent=1 // pred_check
      _
    $region19: #{tpu_custom_call.1} parent=1 // pred_check_branch
      %67 = sbr.rel (0) target = $region21
    $region20: #{tpu_custom_call.1} parent=1 // pred_region
      _
    $region21: #{tpu_custom_call.1} parent=1 // pred_fallthru
      _
    // Predicated region
    $region22: #{tpu_custom_call.1} parent=1 // pred_check
      _
    $region23: #{tpu_custom_call.1} parent=1 // pred_check_branch
      %69 = sbr.rel (0) target = $region25
    $region24: #{tpu_custom_call.1} parent=1 // pred_region
      %71 = vsyncadd [#allocation9], 0
      %s72 = sshll.u32 %s5, 4
      %s73 = int_to_ptr.hbm [resolvable:$true] %s72
      %s74 = sshll.u32 [#allocation10], 4
      %s75 = int_to_ptr.vmem [resolvable:$true] %s74
      %80 = dma.hbm_to_vmem [thread:$0]  %s73, 4096, %s75, [#allocation9], 64, 64, 4
    $region25: #{tpu_custom_call.1} parent=1 // pred_fallthru
      _
    // Predicated region
    $region26: #{tpu_custom_call.1} parent=1 // pred_check
      _
    $region27: #{tpu_custom_call.1} parent=1 // pred_check_branch
      %82 = sbr.rel (0) target = $region29
    $region28: #{tpu_custom_call.1} parent=1 // pred_region
      _
    $region29: #{tpu_custom_call.1} parent=1 // pred_fallthru
      _
    // Predicated region
    $region30: #{tpu_custom_call.1} parent=1 // pred_check
      _
    $region31: #{tpu_custom_call.1} parent=1 // pred_check_branch
      %84 = sbr.rel (0) target = $region33
    $region32: #{tpu_custom_call.1} parent=1 // pred_region
      %86 = dma.done [#allocation3], 2048
    $region33: #{tpu_custom_call.1} parent=1 // pred_fallthru
      _
    // Predicated region
    $region34: #{tpu_custom_call.1} parent=1 // pred_check
      _
    $region35: #{tpu_custom_call.1} parent=1 // pred_check_branch
      %88 = sbr.rel (0) target = $region37
    $region36: #{tpu_custom_call.1} parent=1 // pred_region
      %90 = dma.done [#allocation6], 4096
    $region37: #{tpu_custom_call.1} parent=1 // pred_fallthru
      _
    // Predicated region
    $region38: #{tpu_custom_call.1} parent=1 // pred_check
      _
    $region39: #{tpu_custom_call.1} parent=1 // pred_check_branch
      %92 = sbr.rel (0) target = $region41
    $region40: #{tpu_custom_call.1} parent=1 // pred_region
      %94 = dma.done [#allocation6], 64
    $region41: #{tpu_custom_call.1} parent=1 // pred_fallthru
      _
    // Predicated region
    $region42: #{tpu_custom_call.1} parent=1 // pred_check
      _
    $region43: #{tpu_custom_call.1} parent=1 // pred_check_branch
      %96 = sbr.rel (0) target = $region45
    $region44: #{tpu_custom_call.1} parent=1 // pred_region
      %98 = dma.done [#allocation9], 4096
    $region45: #{tpu_custom_call.1} parent=1 // pred_fallthru
      _
    // Predicated region
    $region46: #{tpu_custom_call.1} parent=1 // pred_check
      _
    $region47: #{tpu_custom_call.1} parent=1 // pred_check_branch
      %100 = sbr.rel (0) target = $region49
    $region48: #{tpu_custom_call.1} parent=1 // pred_region
      %102 = dma.done [#allocation9], 4096
    $region49: #{tpu_custom_call.1} parent=1 // pred_fallthru
      _
    %v103 = vld [vmem:[#allocation2] sm:$0xf]
    %v104 = vld [vmem:[#allocation2 + $0x4] sm:$0xf]
    %v105 = vld [vmem:[#allocation2 + $0x8] sm:$0xf]
    %v106 = vld [vmem:[#allocation2 + $0xc] sm:$0xf]
    %v107 = vld [vmem:[#allocation2 + $0x10] sm:$0xf]
    %v108 = vld [vmem:[#allocation2 + $0x14] sm:$0xf]
    %v109 = vld [vmem:[#allocation2 + $0x18] sm:$0xf]
    %v110 = vld [vmem:[#allocation2 + $0x1c] sm:$0xf]
    %v111 = vld [vmem:[#allocation2 + $0x20] sm:$0xf]
    %v112 = vld [vmem:[#allocation2 + $0x24] sm:$0xf]
    %v113 = vld [vmem:[#allocation2 + $0x28] sm:$0xf]
    %v114 = vld [vmem:[#allocation2 + $0x2c] sm:$0xf]
    %v115 = vld [vmem:[#allocation2 + $0x30] sm:$0xf]
    %v116 = vld [vmem:[#allocation2 + $0x34] sm:$0xf]
    %v117 = vld [vmem:[#allocation2 + $0x38] sm:$0xf]
    %v118 = vld [vmem:[#allocation2 + $0x3c] sm:$0xf]
    %v119 = vld [vmem:[#allocation2 + $0x40] sm:$0xf]
    %v120 = vld [vmem:[#allocation2 + $0x44] sm:$0xf]
    %v121 = vld [vmem:[#allocation2 + $0x48] sm:$0xf]
    %v122 = vld [vmem:[#allocation2 + $0x4c] sm:$0xf]
    %v123 = vld [vmem:[#allocation2 + $0x50] sm:$0xf]
    %v124 = vld [vmem:[#allocation2 + $0x54] sm:$0xf]
    %v125 = vld [vmem:[#allocation2 + $0x58] sm:$0xf]
    %v126 = vld [vmem:[#allocation2 + $0x5c] sm:$0xf]
    %v127 = vld [vmem:[#allocation2 + $0x60] sm:$0xf]
    %v128 = vld [vmem:[#allocation2 + $0x64] sm:$0xf]
    %v129 = vld [vmem:[#allocation2 + $0x68] sm:$0xf]
    %v130 = vld [vmem:[#allocation2 + $0x6c] sm:$0xf]
    %v131 = vld [vmem:[#allocation2 + $0x70] sm:$0xf]
    %v132 = vld [vmem:[#allocation2 + $0x74] sm:$0xf]
    %v133 = vld [vmem:[#allocation2 + $0x78] sm:$0xf]
    %v134 = vld [vmem:[#allocation2 + $0x7c] sm:$0xf]
    %v135 = vld [vmem:[#allocation5] sm:$0xff]
    %v136 = vld [vmem:[#allocation5 + $0x8] sm:$0xff]
    %v137 = vld [vmem:[#allocation5 + $0x10] sm:$0xff]
    %v138 = vld [vmem:[#allocation5 + $0x18] sm:$0xff]
    %v139 = vld [vmem:[#allocation5 + $0x20] sm:$0xff]
    %v140 = vld [vmem:[#allocation5 + $0x28] sm:$0xff]
    %v141 = vld [vmem:[#allocation5 + $0x30] sm:$0xff]
    %v142 = vld [vmem:[#allocation5 + $0x38] sm:$0xff]
    %v143 = vld [vmem:[#allocation5 + $0x40] sm:$0xff]
    %v144 = vld [vmem:[#allocation5 + $0x48] sm:$0xff]
    %v145 = vld [vmem:[#allocation5 + $0x50] sm:$0xff]
    %v146 = vld [vmem:[#allocation5 + $0x58] sm:$0xff]
    %v147 = vld [vmem:[#allocation5 + $0x60] sm:$0xff]
    %v148 = vld [vmem:[#allocation5 + $0x68] sm:$0xff]
    %v149 = vld [vmem:[#allocation5 + $0x70] sm:$0xff]
    %v150 = vld [vmem:[#allocation5 + $0x78] sm:$0xff]
    %v151 = vld [vmem:[#allocation5 + $0x80] sm:$0xff]
    %v152 = vld [vmem:[#allocation5 + $0x88] sm:$0xff]
    %v153 = vld [vmem:[#allocation5 + $0x90] sm:$0xff]
    %v154 = vld [vmem:[#allocation5 + $0x98] sm:$0xff]
    %v155 = vld [vmem:[#allocation5 + $0xa0] sm:$0xff]
    %v156 = vld [vmem:[#allocation5 + $0xa8] sm:$0xff]
    %v157 = vld [vmem:[#allocation5 + $0xb0] sm:$0xff]
    %v158 = vld [vmem:[#allocation5 + $0xb8] sm:$0xff]
    %v159 = vld [vmem:[#allocation5 + $0xc0] sm:$0xff]
    %v160 = vld [vmem:[#allocation5 + $0xc8] sm:$0xff]
    %v161 = vld [vmem:[#allocation5 + $0xd0] sm:$0xff]
    %v162 = vld [vmem:[#allocation5 + $0xd8] sm:$0xff]
    %v163 = vld [vmem:[#allocation5 + $0xe0] sm:$0xff]
    %v164 = vld [vmem:[#allocation5 + $0xe8] sm:$0xff]
    %v165 = vld [vmem:[#allocation5 + $0xf0] sm:$0xff]
    %v166 = vld [vmem:[#allocation5 + $0xf8] sm:$0xff]
    %v167 = vld [vmem:[#allocation7] sm:$0xf]
    %v169 = vperm.slane %v167, 0
    %v170 = vperm.slane %v167, 1
    %v171 = vperm.slane %v167, 2
    %v172 = vperm.slane %v167, 3
    %v209 = vunpack.c.l.b16 %v103
    %v210 = vunpack.c.l.b16 %v104
    %v211 = vunpack.c.l.b16 %v105
    %v212 = vunpack.c.l.b16 %v106
    %v213 = vunpack.c.l.b16 %v107
    %v214 = vunpack.c.l.b16 %v108
    %v215 = vunpack.c.l.b16 %v109
    %v216 = vunpack.c.l.b16 %v110
    %v217 = vunpack.c.l.b16 %v111
    %v218 = vunpack.c.l.b16 %v112
    %v219 = vunpack.c.l.b16 %v113
    %v220 = vunpack.c.l.b16 %v114
    %v221 = vunpack.c.l.b16 %v115
    %v222 = vunpack.c.l.b16 %v116
    %v223 = vunpack.c.l.b16 %v117
    %v224 = vunpack.c.l.b16 %v118
    %v225 = vunpack.c.l.b16 %v119
    %v226 = vunpack.c.l.b16 %v120
    %v227 = vunpack.c.l.b16 %v121
    %v228 = vunpack.c.l.b16 %v122
    %v229 = vunpack.c.l.b16 %v123
    %v230 = vunpack.c.l.b16 %v124
    %v231 = vunpack.c.l.b16 %v125
    %v232 = vunpack.c.l.b16 %v126
    %v233 = vunpack.c.l.b16 %v127
    %v234 = vunpack.c.l.b16 %v128
    %v235 = vunpack.c.l.b16 %v129
    %v236 = vunpack.c.l.b16 %v130
    %v237 = vunpack.c.l.b16 %v131
    %v238 = vunpack.c.l.b16 %v132
    %v239 = vunpack.c.l.b16 %v133
    %v240 = vunpack.c.l.b16 %v134
    %v241 = vpack.c.b16 %v210, %v209
    %v242 = vpack.c.b16 %v212, %v211
    %v243 = vpack.c.b16 %v214, %v213
    %v244 = vpack.c.b16 %v216, %v215
    %v245 = vpack.c.b16 %v218, %v217
    %v246 = vpack.c.b16 %v220, %v219
    %v247 = vpack.c.b16 %v222, %v221
    %v248 = vpack.c.b16 %v224, %v223
    %v249 = vpack.c.b16 %v226, %v225
    %v250 = vpack.c.b16 %v228, %v227
    %v251 = vpack.c.b16 %v230, %v229
    %v252 = vpack.c.b16 %v232, %v231
    %v253 = vpack.c.b16 %v234, %v233
    %v254 = vpack.c.b16 %v236, %v235
    %v255 = vpack.c.b16 %v238, %v237
    %v256 = vpack.c.b16 %v240, %v239
    %v305 = vunpack.c.l.b16 %v135
    %v306 = vunpack.c.h.b16 %v135
    %v307 = vunpack.c.l.b16 %v136
    %v308 = vunpack.c.h.b16 %v136
    %v309 = vunpack.c.l.b16 %v137
    %v310 = vunpack.c.h.b16 %v137
    %v311 = vunpack.c.l.b16 %v138
    %v312 = vunpack.c.h.b16 %v138
    %v313 = vunpack.c.l.b16 %v139
    %v314 = vunpack.c.h.b16 %v139
    %v315 = vunpack.c.l.b16 %v140
    %v316 = vunpack.c.h.b16 %v140
    %v317 = vunpack.c.l.b16 %v141
    %v318 = vunpack.c.h.b16 %v141
    %v319 = vunpack.c.l.b16 %v142
    %v320 = vunpack.c.h.b16 %v142
    %v321 = vunpack.c.l.b16 %v143
    %v322 = vunpack.c.h.b16 %v143
    %v323 = vunpack.c.l.b16 %v144
    %v324 = vunpack.c.h.b16 %v144
    %v325 = vunpack.c.l.b16 %v145
    %v326 = vunpack.c.h.b16 %v145
    %v327 = vunpack.c.l.b16 %v146
    %v328 = vunpack.c.h.b16 %v146
    %v329 = vunpack.c.l.b16 %v147
    %v330 = vunpack.c.h.b16 %v147
    %v331 = vunpack.c.l.b16 %v148
    %v332 = vunpack.c.h.b16 %v148
    %v333 = vunpack.c.l.b16 %v149
    %v334 = vunpack.c.h.b16 %v149
    %v335 = vunpack.c.l.b16 %v150
    %v336 = vunpack.c.h.b16 %v150
    %v337 = vunpack.c.l.b16 %v151
    %v338 = vunpack.c.h.b16 %v151
    %v339 = vunpack.c.l.b16 %v152
    %v340 = vunpack.c.h.b16 %v152
    %v341 = vunpack.c.l.b16 %v153
    %v342 = vunpack.c.h.b16 %v153
    %v343 = vunpack.c.l.b16 %v154
    %v344 = vunpack.c.h.b16 %v154
    %v345 = vunpack.c.l.b16 %v155
    %v346 = vunpack.c.h.b16 %v155
    %v347 = vunpack.c.l.b16 %v156
    %v348 = vunpack.c.h.b16 %v156
    %v349 = vunpack.c.l.b16 %v157
    %v350 = vunpack.c.h.b16 %v157
    %v351 = vunpack.c.l.b16 %v158
    %v352 = vunpack.c.h.b16 %v158
    %v353 = vunpack.c.l.b16 %v159
    %v354 = vunpack.c.h.b16 %v159
    %v355 = vunpack.c.l.b16 %v160
    %v356 = vunpack.c.h.b16 %v160
    %v357 = vunpack.c.l.b16 %v161
    %v358 = vunpack.c.h.b16 %v161
    %v359 = vunpack.c.l.b16 %v162
    %v360 = vunpack.c.h.b16 %v162
    %v361 = vunpack.c.l.b16 %v163
    %v362 = vunpack.c.h.b16 %v163
    %v363 = vunpack.c.l.b16 %v164
    %v364 = vunpack.c.h.b16 %v164
    %v365 = vunpack.c.l.b16 %v165
    %v366 = vunpack.c.h.b16 %v165
    %v367 = vunpack.c.l.b16 %v166
    %v368 = vunpack.c.h.b16 %v166
    %v369 = vpack.c.b16 %v309, %v305
    %v370 = vpack.c.b16 %v310, %v306
    %v371 = vpack.c.b16 %v311, %v307
    %v372 = vpack.c.b16 %v312, %v308
    %v373 = vpack.c.b16 %v317, %v313
    %v374 = vpack.c.b16 %v318, %v314
    %v375 = vpack.c.b16 %v319, %v315
    %v376 = vpack.c.b16 %v320, %v316
    %v377 = vpack.c.b16 %v325, %v321
    %v378 = vpack.c.b16 %v326, %v322
    %v379 = vpack.c.b16 %v327, %v323
    %v380 = vpack.c.b16 %v328, %v324
    %v381 = vpack.c.b16 %v333, %v329
    %v382 = vpack.c.b16 %v334, %v330
    %v383 = vpack.c.b16 %v335, %v331
    %v384 = vpack.c.b16 %v336, %v332
    %v385 = vpack.c.b16 %v341, %v337
    %v386 = vpack.c.b16 %v342, %v338
    %v387 = vpack.c.b16 %v343, %v339
    %v388 = vpack.c.b16 %v344, %v340
    %v389 = vpack.c.b16 %v349, %v345
    %v390 = vpack.c.b16 %v350, %v346
    %v391 = vpack.c.b16 %v351, %v347
    %v392 = vpack.c.b16 %v352, %v348
    %v393 = vpack.c.b16 %v357, %v353
    %v394 = vpack.c.b16 %v358, %v354
    %v395 = vpack.c.b16 %v359, %v355
    %v396 = vpack.c.b16 %v360, %v356
    %v397 = vpack.c.b16 %v365, %v361
    %v398 = vpack.c.b16 %v366, %v362
    %v399 = vpack.c.b16 %v367, %v363
    %v400 = vpack.c.b16 %v368, %v364
    %433 = vmatpush.bf16.msra.mxu0 %v397
    %434 = vmatpush.bf16.msra.mxu0 %v393
    %435 = vmatpush.bf16.msra.mxu0 %v389
    %436 = vmatpush.bf16.msra.mxu0 %v385
    %437 = vmatpush.bf16.msra.mxu0 %v381
    %438 = vmatpush.bf16.msra.mxu0 %v377
    %439 = vmatpush.bf16.msra.mxu0 %v373
    %440 = vmatpush.bf16.msra.mxu0 %v369
    %441 = vmatmul.bf16.gmra.mxu0 %v241
    %v442 = vpop.f32.mrf.mxu0
    %v443 = vadd.f32 %v169, %v442
    %v444 = vpop.f32.mrf.mxu0
    %v445 = vadd.f32 %v169, %v444
    %446 = vmatmul.bf16.gmra.mxu0 %v242
    %v447 = vpop.f32.mrf.mxu0
    %v448 = vadd.f32 %v169, %v447
    %v449 = vpop.f32.mrf.mxu0
    %v450 = vadd.f32 %v169, %v449
    %451 = vmatmul.bf16.gmra.mxu0 %v243
    %v452 = vpop.f32.mrf.mxu0
    %v453 = vadd.f32 %v169, %v452
    %v454 = vpop.f32.mrf.mxu0
    %v455 = vadd.f32 %v169, %v454
    %456 = vmatmul.bf16.gmra.mxu0 %v244
    %v457 = vpop.f32.mrf.mxu0
    %v458 = vadd.f32 %v169, %v457
    %v459 = vpop.f32.mrf.mxu0
    %v460 = vadd.f32 %v169, %v459
    %461 = vmatmul.bf16.gmra.mxu0 %v245
    %v462 = vpop.f32.mrf.mxu0
    %v463 = vadd.f32 %v169, %v462
    %v464 = vpop.f32.mrf.mxu0
    %v465 = vadd.f32 %v169, %v464
    %466 = vmatmul.bf16.gmra.mxu0 %v246
    %v467 = vpop.f32.mrf.mxu0
    %v468 = vadd.f32 %v169, %v467
    %v469 = vpop.f32.mrf.mxu0
    %v470 = vadd.f32 %v169, %v469
    %471 = vmatmul.bf16.gmra.mxu0 %v247
    %v472 = vpop.f32.mrf.mxu0
    %v473 = vadd.f32 %v169, %v472
    %v474 = vpop.f32.mrf.mxu0
    %v475 = vadd.f32 %v169, %v474
    %476 = vmatmul.bf16.gmra.mxu0 %v248
    %v477 = vpop.f32.mrf.mxu0
    %v478 = vadd.f32 %v169, %v477
    %v479 = vpop.f32.mrf.mxu0
    %v480 = vadd.f32 %v169, %v479
    %481 = vmatmul.bf16.gmra.mxu0 %v249
    %v482 = vpop.f32.mrf.mxu0
    %v483 = vadd.f32 %v169, %v482
    %v484 = vpop.f32.mrf.mxu0
    %v485 = vadd.f32 %v169, %v484
    %486 = vmatmul.bf16.gmra.mxu0 %v250
    %v487 = vpop.f32.mrf.mxu0
    %v488 = vadd.f32 %v169, %v487
    %v489 = vpop.f32.mrf.mxu0
    %v490 = vadd.f32 %v169, %v489
    %491 = vmatmul.bf16.gmra.mxu0 %v251
    %v492 = vpop.f32.mrf.mxu0
    %v493 = vadd.f32 %v169, %v492
    %v494 = vpop.f32.mrf.mxu0
    %v495 = vadd.f32 %v169, %v494
    %496 = vmatmul.bf16.gmra.mxu0 %v252
    %v497 = vpop.f32.mrf.mxu0
    %v498 = vadd.f32 %v169, %v497
    %v499 = vpop.f32.mrf.mxu0
    %v500 = vadd.f32 %v169, %v499
    %501 = vmatmul.bf16.gmra.mxu0 %v253
    %v502 = vpop.f32.mrf.mxu0
    %v503 = vadd.f32 %v169, %v502
    %v504 = vpop.f32.mrf.mxu0
    %v505 = vadd.f32 %v169, %v504
    %506 = vmatmul.bf16.gmra.mxu0 %v254
    %v507 = vpop.f32.mrf.mxu0
    %v508 = vadd.f32 %v169, %v507
    %v509 = vpop.f32.mrf.mxu0
    %v510 = vadd.f32 %v169, %v509
    %511 = vmatmul.bf16.gmra.mxu0 %v255
    %v512 = vpop.f32.mrf.mxu0
    %v513 = vadd.f32 %v169, %v512
    %v514 = vpop.f32.mrf.mxu0
    %v515 = vadd.f32 %v169, %v514
    %516 = vmatmul.bf16.gmra.mxu0 %v256
    %v517 = vpop.f32.mrf.mxu0
    %v518 = vadd.f32 %v169, %v517
    %v519 = vpop.f32.mrf.mxu0
    %v520 = vadd.f32 %v169, %v519
    %521 = vdwg.mxu0
    %522 = vmatpush.bf16.msra.mxu0 %v398
    %523 = vmatpush.bf16.msra.mxu0 %v394
    %524 = vmatpush.bf16.msra.mxu0 %v390
    %525 = vmatpush.bf16.msra.mxu0 %v386
    %526 = vmatpush.bf16.msra.mxu0 %v382
    %527 = vmatpush.bf16.msra.mxu0 %v378
    %528 = vmatpush.bf16.msra.mxu0 %v374
    %529 = vmatpush.bf16.msra.mxu0 %v370
    %530 = vmatmul.bf16.gmra.mxu0 %v241
    %v531 = vpop.f32.mrf.mxu0
    %v532 = vadd.f32 %v170, %v531
    %v533 = vpop.f32.mrf.mxu0
    %v534 = vadd.f32 %v170, %v533
    %535 = vmatmul.bf16.gmra.mxu0 %v242
    %v536 = vpop.f32.mrf.mxu0
    %v537 = vadd.f32 %v170, %v536
    %v538 = vpop.f32.mrf.mxu0
    %v539 = vadd.f32 %v170, %v538
    %540 = vmatmul.bf16.gmra.mxu0 %v243
    %v541 = vpop.f32.mrf.mxu0
    %v542 = vadd.f32 %v170, %v541
    %v543 = vpop.f32.mrf.mxu0
    %v544 = vadd.f32 %v170, %v543
    %545 = vmatmul.bf16.gmra.mxu0 %v244
    %v546 = vpop.f32.mrf.mxu0
    %v547 = vadd.f32 %v170, %v546
    %v548 = vpop.f32.mrf.mxu0
    %v549 = vadd.f32 %v170, %v548
    %550 = vmatmul.bf16.gmra.mxu0 %v245
    %v551 = vpop.f32.mrf.mxu0
    %v552 = vadd.f32 %v170, %v551
    %v553 = vpop.f32.mrf.mxu0
    %v554 = vadd.f32 %v170, %v553
    %555 = vmatmul.bf16.gmra.mxu0 %v246
    %v556 = vpop.f32.mrf.mxu0
    %v557 = vadd.f32 %v170, %v556
    %v558 = vpop.f32.mrf.mxu0
    %v559 = vadd.f32 %v170, %v558
    %560 = vmatmul.bf16.gmra.mxu0 %v247
    %v561 = vpop.f32.mrf.mxu0
    %v562 = vadd.f32 %v170, %v561
    %v563 = vpop.f32.mrf.mxu0
    %v564 = vadd.f32 %v170, %v563
    %565 = vmatmul.bf16.gmra.mxu0 %v248
    %v566 = vpop.f32.mrf.mxu0
    %v567 = vadd.f32 %v170, %v566
    %v568 = vpop.f32.mrf.mxu0
    %v569 = vadd.f32 %v170, %v568
    %570 = vmatmul.bf16.gmra.mxu0 %v249
    %v571 = vpop.f32.mrf.mxu0
    %v572 = vadd.f32 %v170, %v571
    %v573 = vpop.f32.mrf.mxu0
    %v574 = vadd.f32 %v170, %v573
    %575 = vmatmul.bf16.gmra.mxu0 %v250
    %v576 = vpop.f32.mrf.mxu0
    %v577 = vadd.f32 %v170, %v576
    %v578 = vpop.f32.mrf.mxu0
    %v579 = vadd.f32 %v170, %v578
    %580 = vmatmul.bf16.gmra.mxu0 %v251
    %v581 = vpop.f32.mrf.mxu0
    %v582 = vadd.f32 %v170, %v581
    %v583 = vpop.f32.mrf.mxu0
    %v584 = vadd.f32 %v170, %v583
    %585 = vmatmul.bf16.gmra.mxu0 %v252
    %v586 = vpop.f32.mrf.mxu0
    %v587 = vadd.f32 %v170, %v586
    %v588 = vpop.f32.mrf.mxu0
    %v589 = vadd.f32 %v170, %v588
    %590 = vmatmul.bf16.gmra.mxu0 %v253
    %v591 = vpop.f32.mrf.mxu0
    %v592 = vadd.f32 %v170, %v591
    %v593 = vpop.f32.mrf.mxu0
    %v594 = vadd.f32 %v170, %v593
    %595 = vmatmul.bf16.gmra.mxu0 %v254
    %v596 = vpop.f32.mrf.mxu0
    %v597 = vadd.f32 %v170, %v596
    %v598 = vpop.f32.mrf.mxu0
    %v599 = vadd.f32 %v170, %v598
    %600 = vmatmul.bf16.gmra.mxu0 %v255
    %v601 = vpop.f32.mrf.mxu0
    %v602 = vadd.f32 %v170, %v601
    %v603 = vpop.f32.mrf.mxu0
    %v604 = vadd.f32 %v170, %v603
    %605 = vmatmul.bf16.gmra.mxu0 %v256
    %v606 = vpop.f32.mrf.mxu0
    %v607 = vadd.f32 %v170, %v606
    %v608 = vpop.f32.mrf.mxu0
    %v609 = vadd.f32 %v170, %v608
    %610 = vdwg.mxu0
    %611 = vmatpush.bf16.msra.mxu0 %v399
    %612 = vmatpush.bf16.msra.mxu0 %v395
    %613 = vmatpush.bf16.msra.mxu0 %v391
    %614 = vmatpush.bf16.msra.mxu0 %v387
    %615 = vmatpush.bf16.msra.mxu0 %v383
    %616 = vmatpush.bf16.msra.mxu0 %v379
    %617 = vmatpush.bf16.msra.mxu0 %v375
    %618 = vmatpush.bf16.msra.mxu0 %v371
    %619 = vmatmul.bf16.gmra.mxu0 %v241
    %v620 = vpop.f32.mrf.mxu0
    %v621 = vadd.f32 %v171, %v620
    %v622 = vpop.f32.mrf.mxu0
    %v623 = vadd.f32 %v171, %v622
    %624 = vmatmul.bf16.gmra.mxu0 %v242
    %v625 = vpop.f32.mrf.mxu0
    %v626 = vadd.f32 %v171, %v625
    %v627 = vpop.f32.mrf.mxu0
    %v628 = vadd.f32 %v171, %v627
    %629 = vmatmul.bf16.gmra.mxu0 %v243
    %v630 = vpop.f32.mrf.mxu0
    %v631 = vadd.f32 %v171, %v630
    %v632 = vpop.f32.mrf.mxu0
    %v633 = vadd.f32 %v171, %v632
    %634 = vmatmul.bf16.gmra.mxu0 %v244
    %v635 = vpop.f32.mrf.mxu0
    %v636 = vadd.f32 %v171, %v635
    %v637 = vpop.f32.mrf.mxu0
    %v638 = vadd.f32 %v171, %v637
    %639 = vmatmul.bf16.gmra.mxu0 %v245
    %v640 = vpop.f32.mrf.mxu0
    %v641 = vadd.f32 %v171, %v640
    %v642 = vpop.f32.mrf.mxu0
    %v643 = vadd.f32 %v171, %v642
    %644 = vmatmul.bf16.gmra.mxu0 %v246
    %v645 = vpop.f32.mrf.mxu0
    %v646 = vadd.f32 %v171, %v645
    %v647 = vpop.f32.mrf.mxu0
    %v648 = vadd.f32 %v171, %v647
    %649 = vmatmul.bf16.gmra.mxu0 %v247
    %v650 = vpop.f32.mrf.mxu0
    %v651 = vadd.f32 %v171, %v650
    %v652 = vpop.f32.mrf.mxu0
    %v653 = vadd.f32 %v171, %v652
    %654 = vmatmul.bf16.gmra.mxu0 %v248
    %v655 = vpop.f32.mrf.mxu0
    %v656 = vadd.f32 %v171, %v655
    %v657 = vpop.f32.mrf.mxu0
    %v658 = vadd.f32 %v171, %v657
    %659 = vmatmul.bf16.gmra.mxu0 %v249
    %v660 = vpop.f32.mrf.mxu0
    %v661 = vadd.f32 %v171, %v660
    %v662 = vpop.f32.mrf.mxu0
    %v663 = vadd.f32 %v171, %v662
    %664 = vmatmul.bf16.gmra.mxu0 %v250
    %v665 = vpop.f32.mrf.mxu0
    %v666 = vadd.f32 %v171, %v665
    %v667 = vpop.f32.mrf.mxu0
    %v668 = vadd.f32 %v171, %v667
    %669 = vmatmul.bf16.gmra.mxu0 %v251
    %v670 = vpop.f32.mrf.mxu0
    %v671 = vadd.f32 %v171, %v670
    %v672 = vpop.f32.mrf.mxu0
    %v673 = vadd.f32 %v171, %v672
    %674 = vmatmul.bf16.gmra.mxu0 %v252
    %v675 = vpop.f32.mrf.mxu0
    %v676 = vadd.f32 %v171, %v675
    %v677 = vpop.f32.mrf.mxu0
    %v678 = vadd.f32 %v171, %v677
    %679 = vmatmul.bf16.gmra.mxu0 %v253
    %v680 = vpop.f32.mrf.mxu0
    %v681 = vadd.f32 %v171, %v680
    %v682 = vpop.f32.mrf.mxu0
    %v683 = vadd.f32 %v171, %v682
    %684 = vmatmul.bf16.gmra.mxu0 %v254
    %v685 = vpop.f32.mrf.mxu0
    %v686 = vadd.f32 %v171, %v685
    %v687 = vpop.f32.mrf.mxu0
    %v688 = vadd.f32 %v171, %v687
    %689 = vmatmul.bf16.gmra.mxu0 %v255
    %v690 = vpop.f32.mrf.mxu0
    %v691 = vadd.f32 %v171, %v690
    %v692 = vpop.f32.mrf.mxu0
    %v693 = vadd.f32 %v171, %v692
    %694 = vmatmul.bf16.gmra.mxu0 %v256
    %v695 = vpop.f32.mrf.mxu0
    %v696 = vadd.f32 %v171, %v695
    %v697 = vpop.f32.mrf.mxu0
    %v698 = vadd.f32 %v171, %v697
    %699 = vdwg.mxu0
    %700 = vmatpush.bf16.msra.mxu0 %v400
    %701 = vmatpush.bf16.msra.mxu0 %v396
    %702 = vmatpush.bf16.msra.mxu0 %v392
    %703 = vmatpush.bf16.msra.mxu0 %v388
    %704 = vmatpush.bf16.msra.mxu0 %v384
    %705 = vmatpush.bf16.msra.mxu0 %v380
    %706 = vmatpush.bf16.msra.mxu0 %v376
    %707 = vmatpush.bf16.msra.mxu0 %v372
    %708 = vmatmul.bf16.gmra.mxu0 %v241
    %v709 = vpop.f32.mrf.mxu0
    %v710 = vadd.f32 %v172, %v709
    %v711 = vpop.f32.mrf.mxu0
    %v712 = vadd.f32 %v172, %v711
    %713 = vmatmul.bf16.gmra.mxu0 %v242
    %v714 = vpop.f32.mrf.mxu0
    %v715 = vadd.f32 %v172, %v714
    %v716 = vpop.f32.mrf.mxu0
    %v717 = vadd.f32 %v172, %v716
    %718 = vmatmul.bf16.gmra.mxu0 %v243
    %v719 = vpop.f32.mrf.mxu0
    %v720 = vadd.f32 %v172, %v719
    %v721 = vpop.f32.mrf.mxu0
    %v722 = vadd.f32 %v172, %v721
    %723 = vmatmul.bf16.gmra.mxu0 %v244
    %v724 = vpop.f32.mrf.mxu0
    %v725 = vadd.f32 %v172, %v724
    %v726 = vpop.f32.mrf.mxu0
    %v727 = vadd.f32 %v172, %v726
    %728 = vmatmul.bf16.gmra.mxu0 %v245
    %v729 = vpop.f32.mrf.mxu0
    %v730 = vadd.f32 %v172, %v729
    %v731 = vpop.f32.mrf.mxu0
    %v732 = vadd.f32 %v172, %v731
    %733 = vmatmul.bf16.gmra.mxu0 %v246
    %v734 = vpop.f32.mrf.mxu0
    %v735 = vadd.f32 %v172, %v734
    %v736 = vpop.f32.mrf.mxu0
    %v737 = vadd.f32 %v172, %v736
    %738 = vmatmul.bf16.gmra.mxu0 %v247
    %v739 = vpop.f32.mrf.mxu0
    %v740 = vadd.f32 %v172, %v739
    %v741 = vpop.f32.mrf.mxu0
    %v742 = vadd.f32 %v172, %v741
    %743 = vmatmul.bf16.gmra.mxu0 %v248
    %v744 = vpop.f32.mrf.mxu0
    %v745 = vadd.f32 %v172, %v744
    %v746 = vpop.f32.mrf.mxu0
    %v747 = vadd.f32 %v172, %v746
    %748 = vmatmul.bf16.gmra.mxu0 %v249
    %v749 = vpop.f32.mrf.mxu0
    %v750 = vadd.f32 %v172, %v749
    %v751 = vpop.f32.mrf.mxu0
    %v752 = vadd.f32 %v172, %v751
    %753 = vmatmul.bf16.gmra.mxu0 %v250
    %v754 = vpop.f32.mrf.mxu0
    %v755 = vadd.f32 %v172, %v754
    %v756 = vpop.f32.mrf.mxu0
    %v757 = vadd.f32 %v172, %v756
    %758 = vmatmul.bf16.gmra.mxu0 %v251
    %v759 = vpop.f32.mrf.mxu0
    %v760 = vadd.f32 %v172, %v759
    %v761 = vpop.f32.mrf.mxu0
    %v762 = vadd.f32 %v172, %v761
    %763 = vmatmul.bf16.gmra.mxu0 %v252
    %v764 = vpop.f32.mrf.mxu0
    %v765 = vadd.f32 %v172, %v764
    %v766 = vpop.f32.mrf.mxu0
    %v767 = vadd.f32 %v172, %v766
    %768 = vmatmul.bf16.gmra.mxu0 %v253
    %v769 = vpop.f32.mrf.mxu0
    %v770 = vadd.f32 %v172, %v769
    %v771 = vpop.f32.mrf.mxu0
    %v772 = vadd.f32 %v172, %v771
    %773 = vmatmul.bf16.gmra.mxu0 %v254
    %v774 = vpop.f32.mrf.mxu0
    %v775 = vadd.f32 %v172, %v774
    %v776 = vpop.f32.mrf.mxu0
    %v777 = vadd.f32 %v172, %v776
    %778 = vmatmul.bf16.gmra.mxu0 %v255
    %v779 = vpop.f32.mrf.mxu0
    %v780 = vadd.f32 %v172, %v779
    %v781 = vpop.f32.mrf.mxu0
    %v782 = vadd.f32 %v172, %v781
    %783 = vmatmul.bf16.gmra.mxu0 %v256
    %v784 = vpop.f32.mrf.mxu0
    %v785 = vadd.f32 %v172, %v784
    %v786 = vpop.f32.mrf.mxu0
    %v787 = vadd.f32 %v172, %v786
    %788 = vdwg.mxu0
    %v789 = vmax.f32 %v443, 0.0
    %v790 = vmax.f32 %v532, 0.0
    %v791 = vmax.f32 %v621, 0.0
    %v792 = vmax.f32 %v710, 0.0
    %v793 = vmax.f32 %v445, 0.0
    %v794 = vmax.f32 %v534, 0.0
    %v795 = vmax.f32 %v623, 0.0
    %v796 = vmax.f32 %v712, 0.0
    %v797 = vmax.f32 %v448, 0.0
    %v798 = vmax.f32 %v537, 0.0
    %v799 = vmax.f32 %v626, 0.0
    %v800 = vmax.f32 %v715, 0.0
    %v801 = vmax.f32 %v450, 0.0
    %v802 = vmax.f32 %v539, 0.0
    %v803 = vmax.f32 %v628, 0.0
    %v804 = vmax.f32 %v717, 0.0
    %v805 = vmax.f32 %v453, 0.0
    %v806 = vmax.f32 %v542, 0.0
    %v807 = vmax.f32 %v631, 0.0
    %v808 = vmax.f32 %v720, 0.0
    %v809 = vmax.f32 %v455, 0.0
    %v810 = vmax.f32 %v544, 0.0
    %v811 = vmax.f32 %v633, 0.0
    %v812 = vmax.f32 %v722, 0.0
    %v813 = vmax.f32 %v458, 0.0
    %v814 = vmax.f32 %v547, 0.0
    %v815 = vmax.f32 %v636, 0.0
    %v816 = vmax.f32 %v725, 0.0
    %v817 = vmax.f32 %v460, 0.0
    %v818 = vmax.f32 %v549, 0.0
    %v819 = vmax.f32 %v638, 0.0
    %v820 = vmax.f32 %v727, 0.0
    %v821 = vmax.f32 %v463, 0.0
    %v822 = vmax.f32 %v552, 0.0
    %v823 = vmax.f32 %v641, 0.0
    %v824 = vmax.f32 %v730, 0.0
    %v825 = vmax.f32 %v465, 0.0
    %v826 = vmax.f32 %v554, 0.0
    %v827 = vmax.f32 %v643, 0.0
    %v828 = vmax.f32 %v732, 0.0
    %v829 = vmax.f32 %v468, 0.0
    %v830 = vmax.f32 %v557, 0.0
    %v831 = vmax.f32 %v646, 0.0
    %v832 = vmax.f32 %v735, 0.0
    %v833 = vmax.f32 %v470, 0.0
    %v834 = vmax.f32 %v559, 0.0
    %v835 = vmax.f32 %v648, 0.0
    %v836 = vmax.f32 %v737, 0.0
    %v837 = vmax.f32 %v473, 0.0
    %v838 = vmax.f32 %v562, 0.0
    %v839 = vmax.f32 %v651, 0.0
    %v840 = vmax.f32 %v740, 0.0
    %v841 = vmax.f32 %v475, 0.0
    %v842 = vmax.f32 %v564, 0.0
    %v843 = vmax.f32 %v653, 0.0
    %v844 = vmax.f32 %v742, 0.0
    %v845 = vmax.f32 %v478, 0.0
    %v846 = vmax.f32 %v567, 0.0
    %v847 = vmax.f32 %v656, 0.0
    %v848 = vmax.f32 %v745, 0.0
    %v849 = vmax.f32 %v480, 0.0
    %v850 = vmax.f32 %v569, 0.0
    %v851 = vmax.f32 %v658, 0.0
    %v852 = vmax.f32 %v747, 0.0
    %v853 = vmax.f32 %v483, 0.0
    %v854 = vmax.f32 %v572, 0.0
    %v855 = vmax.f32 %v661, 0.0
    %v856 = vmax.f32 %v750, 0.0
    %v857 = vmax.f32 %v485, 0.0
    %v858 = vmax.f32 %v574, 0.0
    %v859 = vmax.f32 %v663, 0.0
    %v860 = vmax.f32 %v752, 0.0
    %v861 = vmax.f32 %v488, 0.0
    %v862 = vmax.f32 %v577, 0.0
    %v863 = vmax.f32 %v666, 0.0
    %v864 = vmax.f32 %v755, 0.0
    %v865 = vmax.f32 %v490, 0.0
    %v866 = vmax.f32 %v579, 0.0
    %v867 = vmax.f32 %v668, 0.0
    %v868 = vmax.f32 %v757, 0.0
    %v869 = vmax.f32 %v493, 0.0
    %v870 = vmax.f32 %v582, 0.0
    %v871 = vmax.f32 %v671, 0.0
    %v872 = vmax.f32 %v760, 0.0
    %v873 = vmax.f32 %v495, 0.0
    %v874 = vmax.f32 %v584, 0.0
    %v875 = vmax.f32 %v673, 0.0
    %v876 = vmax.f32 %v762, 0.0
    %v877 = vmax.f32 %v498, 0.0
    %v878 = vmax.f32 %v587, 0.0
    %v879 = vmax.f32 %v676, 0.0
    %v880 = vmax.f32 %v765, 0.0
    %v881 = vmax.f32 %v500, 0.0
    %v882 = vmax.f32 %v589, 0.0
    %v883 = vmax.f32 %v678, 0.0
    %v884 = vmax.f32 %v767, 0.0
    %v885 = vmax.f32 %v503, 0.0
    %v886 = vmax.f32 %v592, 0.0
    %v887 = vmax.f32 %v681, 0.0
    %v888 = vmax.f32 %v770, 0.0
    %v889 = vmax.f32 %v505, 0.0
    %v890 = vmax.f32 %v594, 0.0
    %v891 = vmax.f32 %v683, 0.0
    %v892 = vmax.f32 %v772, 0.0
    %v893 = vmax.f32 %v508, 0.0
    %v894 = vmax.f32 %v597, 0.0
    %v895 = vmax.f32 %v686, 0.0
    %v896 = vmax.f32 %v775, 0.0
    %v897 = vmax.f32 %v510, 0.0
    %v898 = vmax.f32 %v599, 0.0
    %v899 = vmax.f32 %v688, 0.0
    %v900 = vmax.f32 %v777, 0.0
    %v901 = vmax.f32 %v513, 0.0
    %v902 = vmax.f32 %v602, 0.0
    %v903 = vmax.f32 %v691, 0.0
    %v904 = vmax.f32 %v780, 0.0
    %v905 = vmax.f32 %v515, 0.0
    %v906 = vmax.f32 %v604, 0.0
    %v907 = vmax.f32 %v693, 0.0
    %v908 = vmax.f32 %v782, 0.0
    %v909 = vmax.f32 %v518, 0.0
    %v910 = vmax.f32 %v607, 0.0
    %v911 = vmax.f32 %v696, 0.0
    %v912 = vmax.f32 %v785, 0.0
    %v913 = vmax.f32 %v520, 0.0
    %v914 = vmax.f32 %v609, 0.0
    %v915 = vmax.f32 %v698, 0.0
    %v916 = vmax.f32 %v787, 0.0
    %v917 = vpack.c.bf16 %v793, %v789
    %v918 = vpack.c.bf16 %v794, %v790
    %v919 = vpack.c.bf16 %v795, %v791
    %v920 = vpack.c.bf16 %v796, %v792
    %v921 = vpack.c.bf16 %v801, %v797
    %v922 = vpack.c.bf16 %v802, %v798
    %v923 = vpack.c.bf16 %v803, %v799
    %v924 = vpack.c.bf16 %v804, %v800
    %v925 = vpack.c.bf16 %v809, %v805
    %v926 = vpack.c.bf16 %v810, %v806
    %v927 = vpack.c.bf16 %v811, %v807
    %v928 = vpack.c.bf16 %v812, %v808
    %v929 = vpack.c.bf16 %v817, %v813
    %v930 = vpack.c.bf16 %v818, %v814
    %v931 = vpack.c.bf16 %v819, %v815
    %v932 = vpack.c.bf16 %v820, %v816
    %v933 = vpack.c.bf16 %v825, %v821
    %v934 = vpack.c.bf16 %v826, %v822
    %v935 = vpack.c.bf16 %v827, %v823
    %v936 = vpack.c.bf16 %v828, %v824
    %v937 = vpack.c.bf16 %v833, %v829
    %v938 = vpack.c.bf16 %v834, %v830
    %v939 = vpack.c.bf16 %v835, %v831
    %v940 = vpack.c.bf16 %v836, %v832
    %v941 = vpack.c.bf16 %v841, %v837
    %v942 = vpack.c.bf16 %v842, %v838
    %v943 = vpack.c.bf16 %v843, %v839
    %v944 = vpack.c.bf16 %v844, %v840
    %v945 = vpack.c.bf16 %v849, %v845
    %v946 = vpack.c.bf16 %v850, %v846
    %v947 = vpack.c.bf16 %v851, %v847
    %v948 = vpack.c.bf16 %v852, %v848
    %v949 = vpack.c.bf16 %v857, %v853
    %v950 = vpack.c.bf16 %v858, %v854
    %v951 = vpack.c.bf16 %v859, %v855
    %v952 = vpack.c.bf16 %v860, %v856
    %v953 = vpack.c.bf16 %v865, %v861
    %v954 = vpack.c.bf16 %v866, %v862
    %v955 = vpack.c.bf16 %v867, %v863
    %v956 = vpack.c.bf16 %v868, %v864
    %v957 = vpack.c.bf16 %v873, %v869
    %v958 = vpack.c.bf16 %v874, %v870
    %v959 = vpack.c.bf16 %v875, %v871
    %v960 = vpack.c.bf16 %v876, %v872
    %v961 = vpack.c.bf16 %v881, %v877
    %v962 = vpack.c.bf16 %v882, %v878
    %v963 = vpack.c.bf16 %v883, %v879
    %v964 = vpack.c.bf16 %v884, %v880
    %v965 = vpack.c.bf16 %v889, %v885
    %v966 = vpack.c.bf16 %v890, %v886
    %v967 = vpack.c.bf16 %v891, %v887
    %v968 = vpack.c.bf16 %v892, %v888
    %v969 = vpack.c.bf16 %v897, %v893
    %v970 = vpack.c.bf16 %v898, %v894
    %v971 = vpack.c.bf16 %v899, %v895
    %v972 = vpack.c.bf16 %v900, %v896
    %v973 = vpack.c.bf16 %v905, %v901
    %v974 = vpack.c.bf16 %v906, %v902
    %v975 = vpack.c.bf16 %v907, %v903
    %v976 = vpack.c.bf16 %v908, %v904
    %v977 = vpack.c.bf16 %v913, %v909
    %v978 = vpack.c.bf16 %v914, %v910
    %v979 = vpack.c.bf16 %v915, %v911
    %v980 = vpack.c.bf16 %v916, %v912
    %v981 = vld [vmem:[#allocation8] sm:$0xf]
    %v982 = vld [vmem:[#allocation8 + $0x4] sm:$0xf]
    %v983 = vld [vmem:[#allocation8 + $0x8] sm:$0xf]
    %v984 = vld [vmem:[#allocation8 + $0xc] sm:$0xf]
    %v985 = vld [vmem:[#allocation8 + $0x10] sm:$0xf]
    %v986 = vld [vmem:[#allocation8 + $0x14] sm:$0xf]
    %v987 = vld [vmem:[#allocation8 + $0x18] sm:$0xf]
    %v988 = vld [vmem:[#allocation8 + $0x1c] sm:$0xf]
    %v989 = vld [vmem:[#allocation8 + $0x20] sm:$0xf]
    %v990 = vld [vmem:[#allocation8 + $0x24] sm:$0xf]
    %v991 = vld [vmem:[#allocation8 + $0x28] sm:$0xf]
    %v992 = vld [vmem:[#allocation8 + $0x2c] sm:$0xf]
    %v993 = vld [vmem:[#allocation8 + $0x30] sm:$0xf]
    %v994 = vld [vmem:[#allocation8 + $0x34] sm:$0xf]
    %v995 = vld [vmem:[#allocation8 + $0x38] sm:$0xf]
    %v996 = vld [vmem:[#allocation8 + $0x3c] sm:$0xf]
    %v997 = vld [vmem:[#allocation8 + $0x40] sm:$0xf]
    %v998 = vld [vmem:[#allocation8 + $0x44] sm:$0xf]
    %v999 = vld [vmem:[#allocation8 + $0x48] sm:$0xf]
    %v1000 = vld [vmem:[#allocation8 + $0x4c] sm:$0xf]
    %v1001 = vld [vmem:[#allocation8 + $0x50] sm:$0xf]
    %v1002 = vld [vmem:[#allocation8 + $0x54] sm:$0xf]
    %v1003 = vld [vmem:[#allocation8 + $0x58] sm:$0xf]
    %v1004 = vld [vmem:[#allocation8 + $0x5c] sm:$0xf]
    %v1005 = vld [vmem:[#allocation8 + $0x60] sm:$0xf]
    %v1006 = vld [vmem:[#allocation8 + $0x64] sm:$0xf]
    %v1007 = vld [vmem:[#allocation8 + $0x68] sm:$0xf]
    %v1008 = vld [vmem:[#allocation8 + $0x6c] sm:$0xf]
    %v1009 = vld [vmem:[#allocation8 + $0x70] sm:$0xf]
    %v1010 = vld [vmem:[#allocation8 + $0x74] sm:$0xf]
    %v1011 = vld [vmem:[#allocation8 + $0x78] sm:$0xf]
    %v1012 = vld [vmem:[#allocation8 + $0x7c] sm:$0xf]
    %v1013 = vld [vmem:[#allocation8 + $0x80] sm:$0xf]
    %v1014 = vld [vmem:[#allocation8 + $0x84] sm:$0xf]
    %v1015 = vld [vmem:[#allocation8 + $0x88] sm:$0xf]
    %v1016 = vld [vmem:[#allocation8 + $0x8c] sm:$0xf]
    %v1017 = vld [vmem:[#allocation8 + $0x90] sm:$0xf]
    %v1018 = vld [vmem:[#allocation8 + $0x94] sm:$0xf]
    %v1019 = vld [vmem:[#allocation8 + $0x98] sm:$0xf]
    %v1020 = vld [vmem:[#allocation8 + $0x9c] sm:$0xf]
    %v1021 = vld [vmem:[#allocation8 + $0xa0] sm:$0xf]
    %v1022 = vld [vmem:[#allocation8 + $0xa4] sm:$0xf]
    %v1023 = vld [vmem:[#allocation8 + $0xa8] sm:$0xf]
    %v1024 = vld [vmem:[#allocation8 + $0xac] sm:$0xf]
    %v1025 = vld [vmem:[#allocation8 + $0xb0] sm:$0xf]
    %v1026 = vld [vmem:[#allocation8 + $0xb4] sm:$0xf]
    %v1027 = vld [vmem:[#allocation8 + $0xb8] sm:$0xf]
    %v1028 = vld [vmem:[#allocation8 + $0xbc] sm:$0xf]
    %v1029 = vld [vmem:[#allocation8 + $0xc0] sm:$0xf]
    %v1030 = vld [vmem:[#allocation8 + $0xc4] sm:$0xf]
    %v1031 = vld [vmem:[#allocation8 + $0xc8] sm:$0xf]
    %v1032 = vld [vmem:[#allocation8 + $0xcc] sm:$0xf]
    %v1033 = vld [vmem:[#allocation8 + $0xd0] sm:$0xf]
    %v1034 = vld [vmem:[#allocation8 + $0xd4] sm:$0xf]
    %v1035 = vld [vmem:[#allocation8 + $0xd8] sm:$0xf]
    %v1036 = vld [vmem:[#allocation8 + $0xdc] sm:$0xf]
    %v1037 = vld [vmem:[#allocation8 + $0xe0] sm:$0xf]
    %v1038 = vld [vmem:[#allocation8 + $0xe4] sm:$0xf]
    %v1039 = vld [vmem:[#allocation8 + $0xe8] sm:$0xf]
    %v1040 = vld [vmem:[#allocation8 + $0xec] sm:$0xf]
    %v1041 = vld [vmem:[#allocation8 + $0xf0] sm:$0xf]
    %v1042 = vld [vmem:[#allocation8 + $0xf4] sm:$0xf]
    %v1043 = vld [vmem:[#allocation8 + $0xf8] sm:$0xf]
    %v1044 = vld [vmem:[#allocation8 + $0xfc] sm:$0xf]
    %v1045 = vld [vmem:[%s4] sm:$0x1]
    %v1047 = vperm.slane %v1045, 0
    %v1113 = vunpack.c.l.b16 %v981
    %v1114 = vunpack.c.l.b16 %v982
    %v1115 = vunpack.c.l.b16 %v983
    %v1116 = vunpack.c.l.b16 %v984
    %v1117 = vunpack.c.l.b16 %v985
    %v1118 = vunpack.c.l.b16 %v986
    %v1119 = vunpack.c.l.b16 %v987
    %v1120 = vunpack.c.l.b16 %v988
    %v1121 = vunpack.c.l.b16 %v989
    %v1122 = vunpack.c.l.b16 %v990
    %v1123 = vunpack.c.l.b16 %v991
    %v1124 = vunpack.c.l.b16 %v992
    %v1125 = vunpack.c.l.b16 %v993
    %v1126 = vunpack.c.l.b16 %v994
    %v1127 = vunpack.c.l.b16 %v995
    %v1128 = vunpack.c.l.b16 %v996
    %v1129 = vunpack.c.l.b16 %v997
    %v1130 = vunpack.c.l.b16 %v998
    %v1131 = vunpack.c.l.b16 %v999
    %v1132 = vunpack.c.l.b16 %v1000
    %v1133 = vunpack.c.l.b16 %v1001
    %v1134 = vunpack.c.l.b16 %v1002
    %v1135 = vunpack.c.l.b16 %v1003
    %v1136 = vunpack.c.l.b16 %v1004
    %v1137 = vunpack.c.l.b16 %v1005
    %v1138 = vunpack.c.l.b16 %v1006
    %v1139 = vunpack.c.l.b16 %v1007
    %v1140 = vunpack.c.l.b16 %v1008
    %v1141 = vunpack.c.l.b16 %v1009
    %v1142 = vunpack.c.l.b16 %v1010
    %v1143 = vunpack.c.l.b16 %v1011
    %v1144 = vunpack.c.l.b16 %v1012
    %v1145 = vunpack.c.l.b16 %v1013
    %v1146 = vunpack.c.l.b16 %v1014
    %v1147 = vunpack.c.l.b16 %v1015
    %v1148 = vunpack.c.l.b16 %v1016
    %v1149 = vunpack.c.l.b16 %v1017
    %v1150 = vunpack.c.l.b16 %v1018
    %v1151 = vunpack.c.l.b16 %v1019
    %v1152 = vunpack.c.l.b16 %v1020
    %v1153 = vunpack.c.l.b16 %v1021
    %v1154 = vunpack.c.l.b16 %v1022
    %v1155 = vunpack.c.l.b16 %v1023
    %v1156 = vunpack.c.l.b16 %v1024
    %v1157 = vunpack.c.l.b16 %v1025
    %v1158 = vunpack.c.l.b16 %v1026
    %v1159 = vunpack.c.l.b16 %v1027
    %v1160 = vunpack.c.l.b16 %v1028
    %v1161 = vunpack.c.l.b16 %v1029
    %v1162 = vunpack.c.l.b16 %v1030
    %v1163 = vunpack.c.l.b16 %v1031
    %v1164 = vunpack.c.l.b16 %v1032
    %v1165 = vunpack.c.l.b16 %v1033
    %v1166 = vunpack.c.l.b16 %v1034
    %v1167 = vunpack.c.l.b16 %v1035
    %v1168 = vunpack.c.l.b16 %v1036
    %v1169 = vunpack.c.l.b16 %v1037
    %v1170 = vunpack.c.l.b16 %v1038
    %v1171 = vunpack.c.l.b16 %v1039
    %v1172 = vunpack.c.l.b16 %v1040
    %v1173 = vunpack.c.l.b16 %v1041
    %v1174 = vunpack.c.l.b16 %v1042
    %v1175 = vunpack.c.l.b16 %v1043
    %v1176 = vunpack.c.l.b16 %v1044
    %v1177 = vpack.c.b16 %v1114, %v1113
    %v1178 = vpack.c.b16 %v1116, %v1115
    %v1179 = vpack.c.b16 %v1118, %v1117
    %v1180 = vpack.c.b16 %v1120, %v1119
    %v1181 = vpack.c.b16 %v1122, %v1121
    %v1182 = vpack.c.b16 %v1124, %v1123
    %v1183 = vpack.c.b16 %v1126, %v1125
    %v1184 = vpack.c.b16 %v1128, %v1127
    %v1185 = vpack.c.b16 %v1130, %v1129
    %v1186 = vpack.c.b16 %v1132, %v1131
    %v1187 = vpack.c.b16 %v1134, %v1133
    %v1188 = vpack.c.b16 %v1136, %v1135
    %v1189 = vpack.c.b16 %v1138, %v1137
    %v1190 = vpack.c.b16 %v1140, %v1139
    %v1191 = vpack.c.b16 %v1142, %v1141
    %v1192 = vpack.c.b16 %v1144, %v1143
    %v1193 = vpack.c.b16 %v1146, %v1145
    %v1194 = vpack.c.b16 %v1148, %v1147
    %v1195 = vpack.c.b16 %v1150, %v1149
    %v1196 = vpack.c.b16 %v1152, %v1151
    %v1197 = vpack.c.b16 %v1154, %v1153
    %v1198 = vpack.c.b16 %v1156, %v1155
    %v1199 = vpack.c.b16 %v1158, %v1157
    %v1200 = vpack.c.b16 %v1160, %v1159
    %v1201 = vpack.c.b16 %v1162, %v1161
    %v1202 = vpack.c.b16 %v1164, %v1163
    %v1203 = vpack.c.b16 %v1166, %v1165
    %v1204 = vpack.c.b16 %v1168, %v1167
    %v1205 = vpack.c.b16 %v1170, %v1169
    %v1206 = vpack.c.b16 %v1172, %v1171
    %v1207 = vpack.c.b16 %v1174, %v1173
    %v1208 = vpack.c.b16 %v1176, %v1175
    %1241 = vmatpush.bf16.msra.mxu0 %v1184
    %1242 = vmatpush.bf16.msra.mxu0 %v1183
    %1243 = vmatpush.bf16.msra.mxu0 %v1182
    %1244 = vmatpush.bf16.msra.mxu0 %v1181
    %1245 = vmatpush.bf16.msra.mxu0 %v1180
    %1246 = vmatpush.bf16.msra.mxu0 %v1179
    %1247 = vmatpush.bf16.msra.mxu0 %v1178
    %1248 = vmatpush.bf16.msra.mxu0 %v1177
    %1249 = vmatmul.bf16.gmra.mxu0 %v917
    %v1250 = vpop.f32.mrf.mxu0
    %v1251 = vadd.f32 %v1047, %v1250
    %v1252 = vpop.f32.mrf.mxu0
    %v1253 = vadd.f32 %v1047, %v1252
    %1254 = vmatmul.bf16.gmra.mxu0 %v921
    %v1255 = vpop.f32.mrf.mxu0
    %v1256 = vadd.f32 %v1047, %v1255
    %v1257 = vpop.f32.mrf.mxu0
    %v1258 = vadd.f32 %v1047, %v1257
    %1259 = vmatmul.bf16.gmra.mxu0 %v925
    %v1260 = vpop.f32.mrf.mxu0
    %v1261 = vadd.f32 %v1047, %v1260
    %v1262 = vpop.f32.mrf.mxu0
    %v1263 = vadd.f32 %v1047, %v1262
    %1264 = vmatmul.bf16.gmra.mxu0 %v929
    %v1265 = vpop.f32.mrf.mxu0
    %v1266 = vadd.f32 %v1047, %v1265
    %v1267 = vpop.f32.mrf.mxu0
    %v1268 = vadd.f32 %v1047, %v1267
    %1269 = vmatmul.bf16.gmra.mxu0 %v933
    %v1270 = vpop.f32.mrf.mxu0
    %v1271 = vadd.f32 %v1047, %v1270
    %v1272 = vpop.f32.mrf.mxu0
    %v1273 = vadd.f32 %v1047, %v1272
    %1274 = vmatmul.bf16.gmra.mxu0 %v937
    %v1275 = vpop.f32.mrf.mxu0
    %v1276 = vadd.f32 %v1047, %v1275
    %v1277 = vpop.f32.mrf.mxu0
    %v1278 = vadd.f32 %v1047, %v1277
    %1279 = vmatmul.bf16.gmra.mxu0 %v941
    %v1280 = vpop.f32.mrf.mxu0
    %v1281 = vadd.f32 %v1047, %v1280
    %v1282 = vpop.f32.mrf.mxu0
    %v1283 = vadd.f32 %v1047, %v1282
    %1284 = vmatmul.bf16.gmra.mxu0 %v945
    %v1285 = vpop.f32.mrf.mxu0
    %v1286 = vadd.f32 %v1047, %v1285
    %v1287 = vpop.f32.mrf.mxu0
    %v1288 = vadd.f32 %v1047, %v1287
    %1289 = vmatmul.bf16.gmra.mxu0 %v949
    %v1290 = vpop.f32.mrf.mxu0
    %v1291 = vadd.f32 %v1047, %v1290
    %v1292 = vpop.f32.mrf.mxu0
    %v1293 = vadd.f32 %v1047, %v1292
    %1294 = vmatmul.bf16.gmra.mxu0 %v953
    %v1295 = vpop.f32.mrf.mxu0
    %v1296 = vadd.f32 %v1047, %v1295
    %v1297 = vpop.f32.mrf.mxu0
    %v1298 = vadd.f32 %v1047, %v1297
    %1299 = vmatmul.bf16.gmra.mxu0 %v957
    %v1300 = vpop.f32.mrf.mxu0
    %v1301 = vadd.f32 %v1047, %v1300
    %v1302 = vpop.f32.mrf.mxu0
    %v1303 = vadd.f32 %v1047, %v1302
    %1304 = vmatmul.bf16.gmra.mxu0 %v961
    %v1305 = vpop.f32.mrf.mxu0
    %v1306 = vadd.f32 %v1047, %v1305
    %v1307 = vpop.f32.mrf.mxu0
    %v1308 = vadd.f32 %v1047, %v1307
    %1309 = vmatmul.bf16.gmra.mxu0 %v965
    %v1310 = vpop.f32.mrf.mxu0
    %v1311 = vadd.f32 %v1047, %v1310
    %v1312 = vpop.f32.mrf.mxu0
    %v1313 = vadd.f32 %v1047, %v1312
    %1314 = vmatmul.bf16.gmra.mxu0 %v969
    %v1315 = vpop.f32.mrf.mxu0
    %v1316 = vadd.f32 %v1047, %v1315
    %v1317 = vpop.f32.mrf.mxu0
    %v1318 = vadd.f32 %v1047, %v1317
    %1319 = vmatmul.bf16.gmra.mxu0 %v973
    %v1320 = vpop.f32.mrf.mxu0
    %v1321 = vadd.f32 %v1047, %v1320
    %v1322 = vpop.f32.mrf.mxu0
    %v1323 = vadd.f32 %v1047, %v1322
    %1324 = vmatmul.bf16.gmra.mxu0 %v977
    %v1325 = vpop.f32.mrf.mxu0
    %v1326 = vadd.f32 %v1047, %v1325
    %v1327 = vpop.f32.mrf.mxu0
    %v1328 = vadd.f32 %v1047, %v1327
    %1329 = vdwg.mxu0
    %1330 = vmatpush.bf16.msra.mxu0 %v1192
    %1331 = vmatpush.bf16.msra.mxu0 %v1191
    %1332 = vmatpush.bf16.msra.mxu0 %v1190
    %1333 = vmatpush.bf16.msra.mxu0 %v1189
    %1334 = vmatpush.bf16.msra.mxu0 %v1188
    %1335 = vmatpush.bf16.msra.mxu0 %v1187
    %1336 = vmatpush.bf16.msra.mxu0 %v1186
    %1337 = vmatpush.bf16.msra.mxu0 %v1185
    %1338 = vmatmul.bf16.gmra.mxu0 %v918
    %v1339 = vpop.f32.mrf.mxu0
    %v1340 = vadd.f32 %v1251, %v1339
    %v1341 = vpop.f32.mrf.mxu0
    %v1342 = vadd.f32 %v1253, %v1341
    %1343 = vmatmul.bf16.gmra.mxu0 %v922
    %v1344 = vpop.f32.mrf.mxu0
    %v1345 = vadd.f32 %v1256, %v1344
    %v1346 = vpop.f32.mrf.mxu0
    %v1347 = vadd.f32 %v1258, %v1346
    %1348 = vmatmul.bf16.gmra.mxu0 %v926
    %v1349 = vpop.f32.mrf.mxu0
    %v1350 = vadd.f32 %v1261, %v1349
    %v1351 = vpop.f32.mrf.mxu0
    %v1352 = vadd.f32 %v1263, %v1351
    %1353 = vmatmul.bf16.gmra.mxu0 %v930
    %v1354 = vpop.f32.mrf.mxu0
    %v1355 = vadd.f32 %v1266, %v1354
    %v1356 = vpop.f32.mrf.mxu0
    %v1357 = vadd.f32 %v1268, %v1356
    %1358 = vmatmul.bf16.gmra.mxu0 %v934
    %v1359 = vpop.f32.mrf.mxu0
    %v1360 = vadd.f32 %v1271, %v1359
    %v1361 = vpop.f32.mrf.mxu0
    %v1362 = vadd.f32 %v1273, %v1361
    %1363 = vmatmul.bf16.gmra.mxu0 %v938
    %v1364 = vpop.f32.mrf.mxu0
    %v1365 = vadd.f32 %v1276, %v1364
    %v1366 = vpop.f32.mrf.mxu0
    %v1367 = vadd.f32 %v1278, %v1366
    %1368 = vmatmul.bf16.gmra.mxu0 %v942
    %v1369 = vpop.f32.mrf.mxu0
    %v1370 = vadd.f32 %v1281, %v1369
    %v1371 = vpop.f32.mrf.mxu0
    %v1372 = vadd.f32 %v1283, %v1371
    %1373 = vmatmul.bf16.gmra.mxu0 %v946
    %v1374 = vpop.f32.mrf.mxu0
    %v1375 = vadd.f32 %v1286, %v1374
    %v1376 = vpop.f32.mrf.mxu0
    %v1377 = vadd.f32 %v1288, %v1376
    %1378 = vmatmul.bf16.gmra.mxu0 %v950
    %v1379 = vpop.f32.mrf.mxu0
    %v1380 = vadd.f32 %v1291, %v1379
    %v1381 = vpop.f32.mrf.mxu0
    %v1382 = vadd.f32 %v1293, %v1381
    %1383 = vmatmul.bf16.gmra.mxu0 %v954
    %v1384 = vpop.f32.mrf.mxu0
    %v1385 = vadd.f32 %v1296, %v1384
    %v1386 = vpop.f32.mrf.mxu0
    %v1387 = vadd.f32 %v1298, %v1386
    %1388 = vmatmul.bf16.gmra.mxu0 %v958
    %v1389 = vpop.f32.mrf.mxu0
    %v1390 = vadd.f32 %v1301, %v1389
    %v1391 = vpop.f32.mrf.mxu0
    %v1392 = vadd.f32 %v1303, %v1391
    %1393 = vmatmul.bf16.gmra.mxu0 %v962
    %v1394 = vpop.f32.mrf.mxu0
    %v1395 = vadd.f32 %v1306, %v1394
    %v1396 = vpop.f32.mrf.mxu0
    %v1397 = vadd.f32 %v1308, %v1396
    %1398 = vmatmul.bf16.gmra.mxu0 %v966
    %v1399 = vpop.f32.mrf.mxu0
    %v1400 = vadd.f32 %v1311, %v1399
    %v1401 = vpop.f32.mrf.mxu0
    %v1402 = vadd.f32 %v1313, %v1401
    %1403 = vmatmul.bf16.gmra.mxu0 %v970
    %v1404 = vpop.f32.mrf.mxu0
    %v1405 = vadd.f32 %v1316, %v1404
    %v1406 = vpop.f32.mrf.mxu0
    %v1407 = vadd.f32 %v1318, %v1406
    %1408 = vmatmul.bf16.gmra.mxu0 %v974
    %v1409 = vpop.f32.mrf.mxu0
    %v1410 = vadd.f32 %v1321, %v1409
    %v1411 = vpop.f32.mrf.mxu0
    %v1412 = vadd.f32 %v1323, %v1411
    %1413 = vmatmul.bf16.gmra.mxu0 %v978
    %v1414 = vpop.f32.mrf.mxu0
    %v1415 = vadd.f32 %v1326, %v1414
    %v1416 = vpop.f32.mrf.mxu0
    %v1417 = vadd.f32 %v1328, %v1416
    %1418 = vdwg.mxu0
    %1419 = vmatpush.bf16.msra.mxu0 %v1200
    %1420 = vmatpush.bf16.msra.mxu0 %v1199
    %1421 = vmatpush.bf16.msra.mxu0 %v1198
    %1422 = vmatpush.bf16.msra.mxu0 %v1197
    %1423 = vmatpush.bf16.msra.mxu0 %v1196
    %1424 = vmatpush.bf16.msra.mxu0 %v1195
    %1425 = vmatpush.bf16.msra.mxu0 %v1194
    %1426 = vmatpush.bf16.msra.mxu0 %v1193
    %1427 = vmatmul.bf16.gmra.mxu0 %v919
    %v1428 = vpop.f32.mrf.mxu0
    %v1429 = vadd.f32 %v1340, %v1428
    %v1430 = vpop.f32.mrf.mxu0
    %v1431 = vadd.f32 %v1342, %v1430
    %1432 = vmatmul.bf16.gmra.mxu0 %v923
    %v1433 = vpop.f32.mrf.mxu0
    %v1434 = vadd.f32 %v1345, %v1433
    %v1435 = vpop.f32.mrf.mxu0
    %v1436 = vadd.f32 %v1347, %v1435
    %1437 = vmatmul.bf16.gmra.mxu0 %v927
    %v1438 = vpop.f32.mrf.mxu0
    %v1439 = vadd.f32 %v1350, %v1438
    %v1440 = vpop.f32.mrf.mxu0
    %v1441 = vadd.f32 %v1352, %v1440
    %1442 = vmatmul.bf16.gmra.mxu0 %v931
    %v1443 = vpop.f32.mrf.mxu0
    %v1444 = vadd.f32 %v1355, %v1443
    %v1445 = vpop.f32.mrf.mxu0
    %v1446 = vadd.f32 %v1357, %v1445
    %1447 = vmatmul.bf16.gmra.mxu0 %v935
    %v1448 = vpop.f32.mrf.mxu0
    %v1449 = vadd.f32 %v1360, %v1448
    %v1450 = vpop.f32.mrf.mxu0
    %v1451 = vadd.f32 %v1362, %v1450
    %1452 = vmatmul.bf16.gmra.mxu0 %v939
    %v1453 = vpop.f32.mrf.mxu0
    %v1454 = vadd.f32 %v1365, %v1453
    %v1455 = vpop.f32.mrf.mxu0
    %v1456 = vadd.f32 %v1367, %v1455
    %1457 = vmatmul.bf16.gmra.mxu0 %v943
    %v1458 = vpop.f32.mrf.mxu0
    %v1459 = vadd.f32 %v1370, %v1458
    %v1460 = vpop.f32.mrf.mxu0
    %v1461 = vadd.f32 %v1372, %v1460
    %1462 = vmatmul.bf16.gmra.mxu0 %v947
    %v1463 = vpop.f32.mrf.mxu0
    %v1464 = vadd.f32 %v1375, %v1463
    %v1465 = vpop.f32.mrf.mxu0
    %v1466 = vadd.f32 %v1377, %v1465
    %1467 = vmatmul.bf16.gmra.mxu0 %v951
    %v1468 = vpop.f32.mrf.mxu0
    %v1469 = vadd.f32 %v1380, %v1468
    %v1470 = vpop.f32.mrf.mxu0
    %v1471 = vadd.f32 %v1382, %v1470
    %1472 = vmatmul.bf16.gmra.mxu0 %v955
    %v1473 = vpop.f32.mrf.mxu0
    %v1474 = vadd.f32 %v1385, %v1473
    %v1475 = vpop.f32.mrf.mxu0
    %v1476 = vadd.f32 %v1387, %v1475
    %1477 = vmatmul.bf16.gmra.mxu0 %v959
    %v1478 = vpop.f32.mrf.mxu0
    %v1479 = vadd.f32 %v1390, %v1478
    %v1480 = vpop.f32.mrf.mxu0
    %v1481 = vadd.f32 %v1392, %v1480
    %1482 = vmatmul.bf16.gmra.mxu0 %v963
    %v1483 = vpop.f32.mrf.mxu0
    %v1484 = vadd.f32 %v1395, %v1483
    %v1485 = vpop.f32.mrf.mxu0
    %v1486 = vadd.f32 %v1397, %v1485
    %1487 = vmatmul.bf16.gmra.mxu0 %v967
    %v1488 = vpop.f32.mrf.mxu0
    %v1489 = vadd.f32 %v1400, %v1488
    %v1490 = vpop.f32.mrf.mxu0
    %v1491 = vadd.f32 %v1402, %v1490
    %1492 = vmatmul.bf16.gmra.mxu0 %v971
    %v1493 = vpop.f32.mrf.mxu0
    %v1494 = vadd.f32 %v1405, %v1493
    %v1495 = vpop.f32.mrf.mxu0
    %v1496 = vadd.f32 %v1407, %v1495
    %1497 = vmatmul.bf16.gmra.mxu0 %v975
    %v1498 = vpop.f32.mrf.mxu0
    %v1499 = vadd.f32 %v1410, %v1498
    %v1500 = vpop.f32.mrf.mxu0
    %v1501 = vadd.f32 %v1412, %v1500
    %1502 = vmatmul.bf16.gmra.mxu0 %v979
    %v1503 = vpop.f32.mrf.mxu0
    %v1504 = vadd.f32 %v1415, %v1503
    %v1505 = vpop.f32.mrf.mxu0
    %v1506 = vadd.f32 %v1417, %v1505
    %1507 = vdwg.mxu0
    %1508 = vmatpush.bf16.msra.mxu0 %v1208
    %1509 = vmatpush.bf16.msra.mxu0 %v1207
    %1510 = vmatpush.bf16.msra.mxu0 %v1206
    %1511 = vmatpush.bf16.msra.mxu0 %v1205
    %1512 = vmatpush.bf16.msra.mxu0 %v1204
    %1513 = vmatpush.bf16.msra.mxu0 %v1203
    %1514 = vmatpush.bf16.msra.mxu0 %v1202
    %1515 = vmatpush.bf16.msra.mxu0 %v1201
    %1516 = vmatmul.bf16.gmra.mxu0 %v920
    %v1517 = vpop.f32.mrf.mxu0
    %v1518 = vadd.f32 %v1429, %v1517
    %v1519 = vpop.f32.mrf.mxu0
    %v1520 = vadd.f32 %v1431, %v1519
    %1521 = vmatmul.bf16.gmra.mxu0 %v924
    %v1522 = vpop.f32.mrf.mxu0
    %v1523 = vadd.f32 %v1434, %v1522
    %v1524 = vpop.f32.mrf.mxu0
    %v1525 = vadd.f32 %v1436, %v1524
    %1526 = vmatmul.bf16.gmra.mxu0 %v928
    %v1527 = vpop.f32.mrf.mxu0
    %v1528 = vadd.f32 %v1439, %v1527
    %v1529 = vpop.f32.mrf.mxu0
    %v1530 = vadd.f32 %v1441, %v1529
    %1531 = vmatmul.bf16.gmra.mxu0 %v932
    %v1532 = vpop.f32.mrf.mxu0
    %v1533 = vadd.f32 %v1444, %v1532
    %v1534 = vpop.f32.mrf.mxu0
    %v1535 = vadd.f32 %v1446, %v1534
    %1536 = vmatmul.bf16.gmra.mxu0 %v936
    %v1537 = vpop.f32.mrf.mxu0
    %v1538 = vadd.f32 %v1449, %v1537
    %v1539 = vpop.f32.mrf.mxu0
    %v1540 = vadd.f32 %v1451, %v1539
    %1541 = vmatmul.bf16.gmra.mxu0 %v940
    %v1542 = vpop.f32.mrf.mxu0
    %v1543 = vadd.f32 %v1454, %v1542
    %v1544 = vpop.f32.mrf.mxu0
    %v1545 = vadd.f32 %v1456, %v1544
    %1546 = vmatmul.bf16.gmra.mxu0 %v944
    %v1547 = vpop.f32.mrf.mxu0
    %v1548 = vadd.f32 %v1459, %v1547
    %v1549 = vpop.f32.mrf.mxu0
    %v1550 = vadd.f32 %v1461, %v1549
    %1551 = vmatmul.bf16.gmra.mxu0 %v948
    %v1552 = vpop.f32.mrf.mxu0
    %v1553 = vadd.f32 %v1464, %v1552
    %v1554 = vpop.f32.mrf.mxu0
    %v1555 = vadd.f32 %v1466, %v1554
    %1556 = vmatmul.bf16.gmra.mxu0 %v952
    %v1557 = vpop.f32.mrf.mxu0
    %v1558 = vadd.f32 %v1469, %v1557
    %v1559 = vpop.f32.mrf.mxu0
    %v1560 = vadd.f32 %v1471, %v1559
    %1561 = vmatmul.bf16.gmra.mxu0 %v956
    %v1562 = vpop.f32.mrf.mxu0
    %v1563 = vadd.f32 %v1474, %v1562
    %v1564 = vpop.f32.mrf.mxu0
    %v1565 = vadd.f32 %v1476, %v1564
    %1566 = vmatmul.bf16.gmra.mxu0 %v960
    %v1567 = vpop.f32.mrf.mxu0
    %v1568 = vadd.f32 %v1479, %v1567
    %v1569 = vpop.f32.mrf.mxu0
    %v1570 = vadd.f32 %v1481, %v1569
    %1571 = vmatmul.bf16.gmra.mxu0 %v964
    %v1572 = vpop.f32.mrf.mxu0
    %v1573 = vadd.f32 %v1484, %v1572
    %v1574 = vpop.f32.mrf.mxu0
    %v1575 = vadd.f32 %v1486, %v1574
    %1576 = vmatmul.bf16.gmra.mxu0 %v968
    %v1577 = vpop.f32.mrf.mxu0
    %v1578 = vadd.f32 %v1489, %v1577
    %v1579 = vpop.f32.mrf.mxu0
    %v1580 = vadd.f32 %v1491, %v1579
    %1581 = vmatmul.bf16.gmra.mxu0 %v972
    %v1582 = vpop.f32.mrf.mxu0
    %v1583 = vadd.f32 %v1494, %v1582
    %v1584 = vpop.f32.mrf.mxu0
    %v1585 = vadd.f32 %v1496, %v1584
    %1586 = vmatmul.bf16.gmra.mxu0 %v976
    %v1587 = vpop.f32.mrf.mxu0
    %v1588 = vadd.f32 %v1499, %v1587
    %v1589 = vpop.f32.mrf.mxu0
    %v1590 = vadd.f32 %v1501, %v1589
    %1591 = vmatmul.bf16.gmra.mxu0 %v980
    %v1592 = vpop.f32.mrf.mxu0
    %v1593 = vadd.f32 %v1504, %v1592
    %v1594 = vpop.f32.mrf.mxu0
    %v1595 = vadd.f32 %v1506, %v1594
    %1596 = vdwg.mxu0
    %v1597 = vld [vmem:[#allocation10] sm:$0xf]
    %v1598 = vld [vmem:[#allocation10 + $0x4] sm:$0xf]
    %v1599 = vld [vmem:[#allocation10 + $0x8] sm:$0xf]
    %v1600 = vld [vmem:[#allocation10 + $0xc] sm:$0xf]
    %v1601 = vld [vmem:[#allocation10 + $0x10] sm:$0xf]
    %v1602 = vld [vmem:[#allocation10 + $0x14] sm:$0xf]
    %v1603 = vld [vmem:[#allocation10 + $0x18] sm:$0xf]
    %v1604 = vld [vmem:[#allocation10 + $0x1c] sm:$0xf]
    %v1605 = vld [vmem:[#allocation10 + $0x20] sm:$0xf]
    %v1606 = vld [vmem:[#allocation10 + $0x24] sm:$0xf]
    %v1607 = vld [vmem:[#allocation10 + $0x28] sm:$0xf]
    %v1608 = vld [vmem:[#allocation10 + $0x2c] sm:$0xf]
    %v1609 = vld [vmem:[#allocation10 + $0x30] sm:$0xf]
    %v1610 = vld [vmem:[#allocation10 + $0x34] sm:$0xf]
    %v1611 = vld [vmem:[#allocation10 + $0x38] sm:$0xf]
    %v1612 = vld [vmem:[#allocation10 + $0x3c] sm:$0xf]
    %v1613 = vld [vmem:[#allocation10 + $0x40] sm:$0xf]
    %v1614 = vld [vmem:[#allocation10 + $0x44] sm:$0xf]
    %v1615 = vld [vmem:[#allocation10 + $0x48] sm:$0xf]
    %v1616 = vld [vmem:[#allocation10 + $0x4c] sm:$0xf]
    %v1617 = vld [vmem:[#allocation10 + $0x50] sm:$0xf]
    %v1618 = vld [vmem:[#allocation10 + $0x54] sm:$0xf]
    %v1619 = vld [vmem:[#allocation10 + $0x58] sm:$0xf]
    %v1620 = vld [vmem:[#allocation10 + $0x5c] sm:$0xf]
    %v1621 = vld [vmem:[#allocation10 + $0x60] sm:$0xf]
    %v1622 = vld [vmem:[#allocation10 + $0x64] sm:$0xf]
    %v1623 = vld [vmem:[#allocation10 + $0x68] sm:$0xf]
    %v1624 = vld [vmem:[#allocation10 + $0x6c] sm:$0xf]
    %v1625 = vld [vmem:[#allocation10 + $0x70] sm:$0xf]
    %v1626 = vld [vmem:[#allocation10 + $0x74] sm:$0xf]
    %v1627 = vld [vmem:[#allocation10 + $0x78] sm:$0xf]
    %v1628 = vld [vmem:[#allocation10 + $0x7c] sm:$0xf]
    %v1629 = vld [vmem:[#allocation10 + $0x80] sm:$0xf]
    %v1630 = vld [vmem:[#allocation10 + $0x84] sm:$0xf]
    %v1631 = vld [vmem:[#allocation10 + $0x88] sm:$0xf]
    %v1632 = vld [vmem:[#allocation10 + $0x8c] sm:$0xf]
    %v1633 = vld [vmem:[#allocation10 + $0x90] sm:$0xf]
    %v1634 = vld [vmem:[#allocation10 + $0x94] sm:$0xf]
    %v1635 = vld [vmem:[#allocation10 + $0x98] sm:$0xf]
    %v1636 = vld [vmem:[#allocation10 + $0x9c] sm:$0xf]
    %v1637 = vld [vmem:[#allocation10 + $0xa0] sm:$0xf]
    %v1638 = vld [vmem:[#allocation10 + $0xa4] sm:$0xf]
    %v1639 = vld [vmem:[#allocation10 + $0xa8] sm:$0xf]
    %v1640 = vld [vmem:[#allocation10 + $0xac] sm:$0xf]
    %v1641 = vld [vmem:[#allocation10 + $0xb0] sm:$0xf]
    %v1642 = vld [vmem:[#allocation10 + $0xb4] sm:$0xf]
    %v1643 = vld [vmem:[#allocation10 + $0xb8] sm:$0xf]
    %v1644 = vld [vmem:[#allocation10 + $0xbc] sm:$0xf]
    %v1645 = vld [vmem:[#allocation10 + $0xc0] sm:$0xf]
    %v1646 = vld [vmem:[#allocation10 + $0xc4] sm:$0xf]
    %v1647 = vld [vmem:[#allocation10 + $0xc8] sm:$0xf]
    %v1648 = vld [vmem:[#allocation10 + $0xcc] sm:$0xf]
    %v1649 = vld [vmem:[#allocation10 + $0xd0] sm:$0xf]
    %v1650 = vld [vmem:[#allocation10 + $0xd4] sm:$0xf]
    %v1651 = vld [vmem:[#allocation10 + $0xd8] sm:$0xf]
    %v1652 = vld [vmem:[#allocation10 + $0xdc] sm:$0xf]
    %v1653 = vld [vmem:[#allocation10 + $0xe0] sm:$0xf]
    %v1654 = vld [vmem:[#allocation10 + $0xe4] sm:$0xf]
    %v1655 = vld [vmem:[#allocation10 + $0xe8] sm:$0xf]
    %v1656 = vld [vmem:[#allocation10 + $0xec] sm:$0xf]
    %v1657 = vld [vmem:[#allocation10 + $0xf0] sm:$0xf]
    %v1658 = vld [vmem:[#allocation10 + $0xf4] sm:$0xf]
    %v1659 = vld [vmem:[#allocation10 + $0xf8] sm:$0xf]
    %v1660 = vld [vmem:[#allocation10 + $0xfc] sm:$0xf]
    %v1661 = vld [vmem:[%s6] sm:$0x1]
    %v1663 = vperm.slane %v1661, 0
    %v1729 = vunpack.c.l.b16 %v1597
    %v1730 = vunpack.c.l.b16 %v1598
    %v1731 = vunpack.c.l.b16 %v1599
    %v1732 = vunpack.c.l.b16 %v1600
    %v1733 = vunpack.c.l.b16 %v1601
    %v1734 = vunpack.c.l.b16 %v1602
    %v1735 = vunpack.c.l.b16 %v1603
    %v1736 = vunpack.c.l.b16 %v1604
    %v1737 = vunpack.c.l.b16 %v1605
    %v1738 = vunpack.c.l.b16 %v1606
    %v1739 = vunpack.c.l.b16 %v1607
    %v1740 = vunpack.c.l.b16 %v1608
    %v1741 = vunpack.c.l.b16 %v1609
    %v1742 = vunpack.c.l.b16 %v1610
    %v1743 = vunpack.c.l.b16 %v1611
    %v1744 = vunpack.c.l.b16 %v1612
    %v1745 = vunpack.c.l.b16 %v1613
    %v1746 = vunpack.c.l.b16 %v1614
    %v1747 = vunpack.c.l.b16 %v1615
    %v1748 = vunpack.c.l.b16 %v1616
    %v1749 = vunpack.c.l.b16 %v1617
    %v1750 = vunpack.c.l.b16 %v1618
    %v1751 = vunpack.c.l.b16 %v1619
    %v1752 = vunpack.c.l.b16 %v1620
    %v1753 = vunpack.c.l.b16 %v1621
    %v1754 = vunpack.c.l.b16 %v1622
    %v1755 = vunpack.c.l.b16 %v1623
    %v1756 = vunpack.c.l.b16 %v1624
    %v1757 = vunpack.c.l.b16 %v1625
    %v1758 = vunpack.c.l.b16 %v1626
    %v1759 = vunpack.c.l.b16 %v1627
    %v1760 = vunpack.c.l.b16 %v1628
    %v1761 = vunpack.c.l.b16 %v1629
    %v1762 = vunpack.c.l.b16 %v1630
    %v1763 = vunpack.c.l.b16 %v1631
    %v1764 = vunpack.c.l.b16 %v1632
    %v1765 = vunpack.c.l.b16 %v1633
    %v1766 = vunpack.c.l.b16 %v1634
    %v1767 = vunpack.c.l.b16 %v1635
    %v1768 = vunpack.c.l.b16 %v1636
    %v1769 = vunpack.c.l.b16 %v1637
    %v1770 = vunpack.c.l.b16 %v1638
    %v1771 = vunpack.c.l.b16 %v1639
    %v1772 = vunpack.c.l.b16 %v1640
    %v1773 = vunpack.c.l.b16 %v1641
    %v1774 = vunpack.c.l.b16 %v1642
    %v1775 = vunpack.c.l.b16 %v1643
    %v1776 = vunpack.c.l.b16 %v1644
    %v1777 = vunpack.c.l.b16 %v1645
    %v1778 = vunpack.c.l.b16 %v1646
    %v1779 = vunpack.c.l.b16 %v1647
    %v1780 = vunpack.c.l.b16 %v1648
    %v1781 = vunpack.c.l.b16 %v1649
    %v1782 = vunpack.c.l.b16 %v1650
    %v1783 = vunpack.c.l.b16 %v1651
    %v1784 = vunpack.c.l.b16 %v1652
    %v1785 = vunpack.c.l.b16 %v1653
    %v1786 = vunpack.c.l.b16 %v1654
    %v1787 = vunpack.c.l.b16 %v1655
    %v1788 = vunpack.c.l.b16 %v1656
    %v1789 = vunpack.c.l.b16 %v1657
    %v1790 = vunpack.c.l.b16 %v1658
    %v1791 = vunpack.c.l.b16 %v1659
    %v1792 = vunpack.c.l.b16 %v1660
    %v1793 = vpack.c.b16 %v1730, %v1729
    %v1794 = vpack.c.b16 %v1732, %v1731
    %v1795 = vpack.c.b16 %v1734, %v1733
    %v1796 = vpack.c.b16 %v1736, %v1735
    %v1797 = vpack.c.b16 %v1738, %v1737
    %v1798 = vpack.c.b16 %v1740, %v1739
    %v1799 = vpack.c.b16 %v1742, %v1741
    %v1800 = vpack.c.b16 %v1744, %v1743
    %v1801 = vpack.c.b16 %v1746, %v1745
    %v1802 = vpack.c.b16 %v1748, %v1747
    %v1803 = vpack.c.b16 %v1750, %v1749
    %v1804 = vpack.c.b16 %v1752, %v1751
    %v1805 = vpack.c.b16 %v1754, %v1753
    %v1806 = vpack.c.b16 %v1756, %v1755
    %v1807 = vpack.c.b16 %v1758, %v1757
    %v1808 = vpack.c.b16 %v1760, %v1759
    %v1809 = vpack.c.b16 %v1762, %v1761
    %v1810 = vpack.c.b16 %v1764, %v1763
    %v1811 = vpack.c.b16 %v1766, %v1765
    %v1812 = vpack.c.b16 %v1768, %v1767
    %v1813 = vpack.c.b16 %v1770, %v1769
    %v1814 = vpack.c.b16 %v1772, %v1771
    %v1815 = vpack.c.b16 %v1774, %v1773
    %v1816 = vpack.c.b16 %v1776, %v1775
    %v1817 = vpack.c.b16 %v1778, %v1777
    %v1818 = vpack.c.b16 %v1780, %v1779
    %v1819 = vpack.c.b16 %v1782, %v1781
    %v1820 = vpack.c.b16 %v1784, %v1783
    %v1821 = vpack.c.b16 %v1786, %v1785
    %v1822 = vpack.c.b16 %v1788, %v1787
    %v1823 = vpack.c.b16 %v1790, %v1789
    %v1824 = vpack.c.b16 %v1792, %v1791
    %1857 = vmatpush.bf16.msra.mxu0 %v1800
    %1858 = vmatpush.bf16.msra.mxu0 %v1799
    %1859 = vmatpush.bf16.msra.mxu0 %v1798
    %1860 = vmatpush.bf16.msra.mxu0 %v1797
    %1861 = vmatpush.bf16.msra.mxu0 %v1796
    %1862 = vmatpush.bf16.msra.mxu0 %v1795
    %1863 = vmatpush.bf16.msra.mxu0 %v1794
    %1864 = vmatpush.bf16.msra.mxu0 %v1793
    %1865 = vmatmul.bf16.gmra.mxu0 %v917
    %v1866 = vpop.f32.mrf.mxu0
    %v1867 = vadd.f32 %v1663, %v1866
    %v1868 = vpop.f32.mrf.mxu0
    %v1869 = vadd.f32 %v1663, %v1868
    %1870 = vmatmul.bf16.gmra.mxu0 %v921
    %v1871 = vpop.f32.mrf.mxu0
    %v1872 = vadd.f32 %v1663, %v1871
    %v1873 = vpop.f32.mrf.mxu0
    %v1874 = vadd.f32 %v1663, %v1873
    %1875 = vmatmul.bf16.gmra.mxu0 %v925
    %v1876 = vpop.f32.mrf.mxu0
    %v1877 = vadd.f32 %v1663, %v1876
    %v1878 = vpop.f32.mrf.mxu0
    %v1879 = vadd.f32 %v1663, %v1878
    %1880 = vmatmul.bf16.gmra.mxu0 %v929
    %v1881 = vpop.f32.mrf.mxu0
    %v1882 = vadd.f32 %v1663, %v1881
    %v1883 = vpop.f32.mrf.mxu0
    %v1884 = vadd.f32 %v1663, %v1883
    %1885 = vmatmul.bf16.gmra.mxu0 %v933
    %v1886 = vpop.f32.mrf.mxu0
    %v1887 = vadd.f32 %v1663, %v1886
    %v1888 = vpop.f32.mrf.mxu0
    %v1889 = vadd.f32 %v1663, %v1888
    %1890 = vmatmul.bf16.gmra.mxu0 %v937
    %v1891 = vpop.f32.mrf.mxu0
    %v1892 = vadd.f32 %v1663, %v1891
    %v1893 = vpop.f32.mrf.mxu0
    %v1894 = vadd.f32 %v1663, %v1893
    %1895 = vmatmul.bf16.gmra.mxu0 %v941
    %v1896 = vpop.f32.mrf.mxu0
    %v1897 = vadd.f32 %v1663, %v1896
    %v1898 = vpop.f32.mrf.mxu0
    %v1899 = vadd.f32 %v1663, %v1898
    %1900 = vmatmul.bf16.gmra.mxu0 %v945
    %v1901 = vpop.f32.mrf.mxu0
    %v1902 = vadd.f32 %v1663, %v1901
    %v1903 = vpop.f32.mrf.mxu0
    %v1904 = vadd.f32 %v1663, %v1903
    %1905 = vmatmul.bf16.gmra.mxu0 %v949
    %v1906 = vpop.f32.mrf.mxu0
    %v1907 = vadd.f32 %v1663, %v1906
    %v1908 = vpop.f32.mrf.mxu0
    %v1909 = vadd.f32 %v1663, %v1908
    %1910 = vmatmul.bf16.gmra.mxu0 %v953
    %v1911 = vpop.f32.mrf.mxu0
    %v1912 = vadd.f32 %v1663, %v1911
    %v1913 = vpop.f32.mrf.mxu0
    %v1914 = vadd.f32 %v1663, %v1913
    %1915 = vmatmul.bf16.gmra.mxu0 %v957
    %v1916 = vpop.f32.mrf.mxu0
    %v1917 = vadd.f32 %v1663, %v1916
    %v1918 = vpop.f32.mrf.mxu0
    %v1919 = vadd.f32 %v1663, %v1918
    %1920 = vmatmul.bf16.gmra.mxu0 %v961
    %v1921 = vpop.f32.mrf.mxu0
    %v1922 = vadd.f32 %v1663, %v1921
    %v1923 = vpop.f32.mrf.mxu0
    %v1924 = vadd.f32 %v1663, %v1923
    %1925 = vmatmul.bf16.gmra.mxu0 %v965
    %v1926 = vpop.f32.mrf.mxu0
    %v1927 = vadd.f32 %v1663, %v1926
    %v1928 = vpop.f32.mrf.mxu0
    %v1929 = vadd.f32 %v1663, %v1928
    %1930 = vmatmul.bf16.gmra.mxu0 %v969
    %v1931 = vpop.f32.mrf.mxu0
    %v1932 = vadd.f32 %v1663, %v1931
    %v1933 = vpop.f32.mrf.mxu0
    %v1934 = vadd.f32 %v1663, %v1933
    %1935 = vmatmul.bf16.gmra.mxu0 %v973
    %v1936 = vpop.f32.mrf.mxu0
    %v1937 = vadd.f32 %v1663, %v1936
    %v1938 = vpop.f32.mrf.mxu0
    %v1939 = vadd.f32 %v1663, %v1938
    %1940 = vmatmul.bf16.gmra.mxu0 %v977
    %v1941 = vpop.f32.mrf.mxu0
    %v1942 = vadd.f32 %v1663, %v1941
    %v1943 = vpop.f32.mrf.mxu0
    %v1944 = vadd.f32 %v1663, %v1943
    %1945 = vdwg.mxu0
    %1946 = vmatpush.bf16.msra.mxu0 %v1808
    %1947 = vmatpush.bf16.msra.mxu0 %v1807
    %1948 = vmatpush.bf16.msra.mxu0 %v1806
    %1949 = vmatpush.bf16.msra.mxu0 %v1805
    %1950 = vmatpush.bf16.msra.mxu0 %v1804
    %1951 = vmatpush.bf16.msra.mxu0 %v1803
    %1952 = vmatpush.bf16.msra.mxu0 %v1802
    %1953 = vmatpush.bf16.msra.mxu0 %v1801
    %1954 = vmatmul.bf16.gmra.mxu0 %v918
    %v1955 = vpop.f32.mrf.mxu0
    %v1956 = vadd.f32 %v1867, %v1955
    %v1957 = vpop.f32.mrf.mxu0
    %v1958 = vadd.f32 %v1869, %v1957
    %1959 = vmatmul.bf16.gmra.mxu0 %v922
    %v1960 = vpop.f32.mrf.mxu0
    %v1961 = vadd.f32 %v1872, %v1960
    %v1962 = vpop.f32.mrf.mxu0
    %v1963 = vadd.f32 %v1874, %v1962
    %1964 = vmatmul.bf16.gmra.mxu0 %v926
    %v1965 = vpop.f32.mrf.mxu0
    %v1966 = vadd.f32 %v1877, %v1965
    %v1967 = vpop.f32.mrf.mxu0
    %v1968 = vadd.f32 %v1879, %v1967
    %1969 = vmatmul.bf16.gmra.mxu0 %v930
    %v1970 = vpop.f32.mrf.mxu0
    %v1971 = vadd.f32 %v1882, %v1970
    %v1972 = vpop.f32.mrf.mxu0
    %v1973 = vadd.f32 %v1884, %v1972
    %1974 = vmatmul.bf16.gmra.mxu0 %v934
    %v1975 = vpop.f32.mrf.mxu0
    %v1976 = vadd.f32 %v1887, %v1975
    %v1977 = vpop.f32.mrf.mxu0
    %v1978 = vadd.f32 %v1889, %v1977
    %1979 = vmatmul.bf16.gmra.mxu0 %v938
    %v1980 = vpop.f32.mrf.mxu0
    %v1981 = vadd.f32 %v1892, %v1980
    %v1982 = vpop.f32.mrf.mxu0
    %v1983 = vadd.f32 %v1894, %v1982
    %1984 = vmatmul.bf16.gmra.mxu0 %v942
    %v1985 = vpop.f32.mrf.mxu0
    %v1986 = vadd.f32 %v1897, %v1985
    %v1987 = vpop.f32.mrf.mxu0
    %v1988 = vadd.f32 %v1899, %v1987
    %1989 = vmatmul.bf16.gmra.mxu0 %v946
    %v1990 = vpop.f32.mrf.mxu0
    %v1991 = vadd.f32 %v1902, %v1990
    %v1992 = vpop.f32.mrf.mxu0
    %v1993 = vadd.f32 %v1904, %v1992
    %1994 = vmatmul.bf16.gmra.mxu0 %v950
    %v1995 = vpop.f32.mrf.mxu0
    %v1996 = vadd.f32 %v1907, %v1995
    %v1997 = vpop.f32.mrf.mxu0
    %v1998 = vadd.f32 %v1909, %v1997
    %1999 = vmatmul.bf16.gmra.mxu0 %v954
    %v2000 = vpop.f32.mrf.mxu0
    %v2001 = vadd.f32 %v1912, %v2000
    %v2002 = vpop.f32.mrf.mxu0
    %v2003 = vadd.f32 %v1914, %v2002
    %2004 = vmatmul.bf16.gmra.mxu0 %v958
    %v2005 = vpop.f32.mrf.mxu0
    %v2006 = vadd.f32 %v1917, %v2005
    %v2007 = vpop.f32.mrf.mxu0
    %v2008 = vadd.f32 %v1919, %v2007
    %2009 = vmatmul.bf16.gmra.mxu0 %v962
    %v2010 = vpop.f32.mrf.mxu0
    %v2011 = vadd.f32 %v1922, %v2010
    %v2012 = vpop.f32.mrf.mxu0
    %v2013 = vadd.f32 %v1924, %v2012
    %2014 = vmatmul.bf16.gmra.mxu0 %v966
    %v2015 = vpop.f32.mrf.mxu0
    %v2016 = vadd.f32 %v1927, %v2015
    %v2017 = vpop.f32.mrf.mxu0
    %v2018 = vadd.f32 %v1929, %v2017
    %2019 = vmatmul.bf16.gmra.mxu0 %v970
    %v2020 = vpop.f32.mrf.mxu0
    %v2021 = vadd.f32 %v1932, %v2020
    %v2022 = vpop.f32.mrf.mxu0
    %v2023 = vadd.f32 %v1934, %v2022
    %2024 = vmatmul.bf16.gmra.mxu0 %v974
    %v2025 = vpop.f32.mrf.mxu0
    %v2026 = vadd.f32 %v1937, %v2025
    %v2027 = vpop.f32.mrf.mxu0
    %v2028 = vadd.f32 %v1939, %v2027
    %2029 = vmatmul.bf16.gmra.mxu0 %v978
    %v2030 = vpop.f32.mrf.mxu0
    %v2031 = vadd.f32 %v1942, %v2030
    %v2032 = vpop.f32.mrf.mxu0
    %v2033 = vadd.f32 %v1944, %v2032
    %2034 = vdwg.mxu0
    %2035 = vmatpush.bf16.msra.mxu0 %v1816
    %2036 = vmatpush.bf16.msra.mxu0 %v1815
    %2037 = vmatpush.bf16.msra.mxu0 %v1814
    %2038 = vmatpush.bf16.msra.mxu0 %v1813
    %2039 = vmatpush.bf16.msra.mxu0 %v1812
    %2040 = vmatpush.bf16.msra.mxu0 %v1811
    %2041 = vmatpush.bf16.msra.mxu0 %v1810
    %2042 = vmatpush.bf16.msra.mxu0 %v1809
    %2043 = vmatmul.bf16.gmra.mxu0 %v919
    %v2044 = vpop.f32.mrf.mxu0
    %v2045 = vadd.f32 %v1956, %v2044
    %v2046 = vpop.f32.mrf.mxu0
    %v2047 = vadd.f32 %v1958, %v2046
    %2048 = vmatmul.bf16.gmra.mxu0 %v923
    %v2049 = vpop.f32.mrf.mxu0
    %v2050 = vadd.f32 %v1961, %v2049
    %v2051 = vpop.f32.mrf.mxu0
    %v2052 = vadd.f32 %v1963, %v2051
    %2053 = vmatmul.bf16.gmra.mxu0 %v927
    %v2054 = vpop.f32.mrf.mxu0
    %v2055 = vadd.f32 %v1966, %v2054
    %v2056 = vpop.f32.mrf.mxu0
    %v2057 = vadd.f32 %v1968, %v2056
    %2058 = vmatmul.bf16.gmra.mxu0 %v931
    %v2059 = vpop.f32.mrf.mxu0
    %v2060 = vadd.f32 %v1971, %v2059
    %v2061 = vpop.f32.mrf.mxu0
    %v2062 = vadd.f32 %v1973, %v2061
    %2063 = vmatmul.bf16.gmra.mxu0 %v935
    %v2064 = vpop.f32.mrf.mxu0
    %v2065 = vadd.f32 %v1976, %v2064
    %v2066 = vpop.f32.mrf.mxu0
    %v2067 = vadd.f32 %v1978, %v2066
    %2068 = vmatmul.bf16.gmra.mxu0 %v939
    %v2069 = vpop.f32.mrf.mxu0
    %v2070 = vadd.f32 %v1981, %v2069
    %v2071 = vpop.f32.mrf.mxu0
    %v2072 = vadd.f32 %v1983, %v2071
    %2073 = vmatmul.bf16.gmra.mxu0 %v943
    %v2074 = vpop.f32.mrf.mxu0
    %v2075 = vadd.f32 %v1986, %v2074
    %v2076 = vpop.f32.mrf.mxu0
    %v2077 = vadd.f32 %v1988, %v2076
    %2078 = vmatmul.bf16.gmra.mxu0 %v947
    %v2079 = vpop.f32.mrf.mxu0
    %v2080 = vadd.f32 %v1991, %v2079
    %v2081 = vpop.f32.mrf.mxu0
    %v2082 = vadd.f32 %v1993, %v2081
    %2083 = vmatmul.bf16.gmra.mxu0 %v951
    %v2084 = vpop.f32.mrf.mxu0
    %v2085 = vadd.f32 %v1996, %v2084
    %v2086 = vpop.f32.mrf.mxu0
    %v2087 = vadd.f32 %v1998, %v2086
    %2088 = vmatmul.bf16.gmra.mxu0 %v955
    %v2089 = vpop.f32.mrf.mxu0
    %v2090 = vadd.f32 %v2001, %v2089
    %v2091 = vpop.f32.mrf.mxu0
    %v2092 = vadd.f32 %v2003, %v2091
    %2093 = vmatmul.bf16.gmra.mxu0 %v959
    %v2094 = vpop.f32.mrf.mxu0
    %v2095 = vadd.f32 %v2006, %v2094
    %v2096 = vpop.f32.mrf.mxu0
    %v2097 = vadd.f32 %v2008, %v2096
    %2098 = vmatmul.bf16.gmra.mxu0 %v963
    %v2099 = vpop.f32.mrf.mxu0
    %v2100 = vadd.f32 %v2011, %v2099
    %v2101 = vpop.f32.mrf.mxu0
    %v2102 = vadd.f32 %v2013, %v2101
    %2103 = vmatmul.bf16.gmra.mxu0 %v967
    %v2104 = vpop.f32.mrf.mxu0
    %v2105 = vadd.f32 %v2016, %v2104
    %v2106 = vpop.f32.mrf.mxu0
    %v2107 = vadd.f32 %v2018, %v2106
    %2108 = vmatmul.bf16.gmra.mxu0 %v971
    %v2109 = vpop.f32.mrf.mxu0
    %v2110 = vadd.f32 %v2021, %v2109
    %v2111 = vpop.f32.mrf.mxu0
    %v2112 = vadd.f32 %v2023, %v2111
    %2113 = vmatmul.bf16.gmra.mxu0 %v975
    %v2114 = vpop.f32.mrf.mxu0
    %v2115 = vadd.f32 %v2026, %v2114
    %v2116 = vpop.f32.mrf.mxu0
    %v2117 = vadd.f32 %v2028, %v2116
    %2118 = vmatmul.bf16.gmra.mxu0 %v979
    %v2119 = vpop.f32.mrf.mxu0
    %v2120 = vadd.f32 %v2031, %v2119
    %v2121 = vpop.f32.mrf.mxu0
    %v2122 = vadd.f32 %v2033, %v2121
    %2123 = vdwg.mxu0
    %2124 = vmatpush.bf16.msra.mxu0 %v1824
    %2125 = vmatpush.bf16.msra.mxu0 %v1823
    %2126 = vmatpush.bf16.msra.mxu0 %v1822
    %2127 = vmatpush.bf16.msra.mxu0 %v1821
    %2128 = vmatpush.bf16.msra.mxu0 %v1820
    %2129 = vmatpush.bf16.msra.mxu0 %v1819
    %2130 = vmatpush.bf16.msra.mxu0 %v1818
    %2131 = vmatpush.bf16.msra.mxu0 %v1817
    %2132 = vmatmul.bf16.gmra.mxu0 %v920
    %v2133 = vpop.f32.mrf.mxu0
    %v2134 = vadd.f32 %v2045, %v2133
    %v2135 = vpop.f32.mrf.mxu0
    %v2136 = vadd.f32 %v2047, %v2135
    %2137 = vmatmul.bf16.gmra.mxu0 %v924
    %v2138 = vpop.f32.mrf.mxu0
    %v2139 = vadd.f32 %v2050, %v2138
    %v2140 = vpop.f32.mrf.mxu0
    %v2141 = vadd.f32 %v2052, %v2140
    %2142 = vmatmul.bf16.gmra.mxu0 %v928
    %v2143 = vpop.f32.mrf.mxu0
    %v2144 = vadd.f32 %v2055, %v2143
    %v2145 = vpop.f32.mrf.mxu0
    %v2146 = vadd.f32 %v2057, %v2145
    %2147 = vmatmul.bf16.gmra.mxu0 %v932
    %v2148 = vpop.f32.mrf.mxu0
    %v2149 = vadd.f32 %v2060, %v2148
    %v2150 = vpop.f32.mrf.mxu0
    %v2151 = vadd.f32 %v2062, %v2150
    %2152 = vmatmul.bf16.gmra.mxu0 %v936
    %v2153 = vpop.f32.mrf.mxu0
    %v2154 = vadd.f32 %v2065, %v2153
    %v2155 = vpop.f32.mrf.mxu0
    %v2156 = vadd.f32 %v2067, %v2155
    %2157 = vmatmul.bf16.gmra.mxu0 %v940
    %v2158 = vpop.f32.mrf.mxu0
    %v2159 = vadd.f32 %v2070, %v2158
    %v2160 = vpop.f32.mrf.mxu0
    %v2161 = vadd.f32 %v2072, %v2160
    %2162 = vmatmul.bf16.gmra.mxu0 %v944
    %v2163 = vpop.f32.mrf.mxu0
    %v2164 = vadd.f32 %v2075, %v2163
    %v2165 = vpop.f32.mrf.mxu0
    %v2166 = vadd.f32 %v2077, %v2165
    %2167 = vmatmul.bf16.gmra.mxu0 %v948
    %v2168 = vpop.f32.mrf.mxu0
    %v2169 = vadd.f32 %v2080, %v2168
    %v2170 = vpop.f32.mrf.mxu0
    %v2171 = vadd.f32 %v2082, %v2170
    %2172 = vmatmul.bf16.gmra.mxu0 %v952
    %v2173 = vpop.f32.mrf.mxu0
    %v2174 = vadd.f32 %v2085, %v2173
    %v2175 = vpop.f32.mrf.mxu0
    %v2176 = vadd.f32 %v2087, %v2175
    %2177 = vmatmul.bf16.gmra.mxu0 %v956
    %v2178 = vpop.f32.mrf.mxu0
    %v2179 = vadd.f32 %v2090, %v2178
    %v2180 = vpop.f32.mrf.mxu0
    %v2181 = vadd.f32 %v2092, %v2180
    %2182 = vmatmul.bf16.gmra.mxu0 %v960
    %v2183 = vpop.f32.mrf.mxu0
    %v2184 = vadd.f32 %v2095, %v2183
    %v2185 = vpop.f32.mrf.mxu0
    %v2186 = vadd.f32 %v2097, %v2185
    %2187 = vmatmul.bf16.gmra.mxu0 %v964
    %v2188 = vpop.f32.mrf.mxu0
    %v2189 = vadd.f32 %v2100, %v2188
    %v2190 = vpop.f32.mrf.mxu0
    %v2191 = vadd.f32 %v2102, %v2190
    %2192 = vmatmul.bf16.gmra.mxu0 %v968
    %v2193 = vpop.f32.mrf.mxu0
    %v2194 = vadd.f32 %v2105, %v2193
    %v2195 = vpop.f32.mrf.mxu0
    %v2196 = vadd.f32 %v2107, %v2195
    %2197 = vmatmul.bf16.gmra.mxu0 %v972
    %v2198 = vpop.f32.mrf.mxu0
    %v2199 = vadd.f32 %v2110, %v2198
    %v2200 = vpop.f32.mrf.mxu0
    %v2201 = vadd.f32 %v2112, %v2200
    %2202 = vmatmul.bf16.gmra.mxu0 %v976
    %v2203 = vpop.f32.mrf.mxu0
    %v2204 = vadd.f32 %v2115, %v2203
    %v2205 = vpop.f32.mrf.mxu0
    %v2206 = vadd.f32 %v2117, %v2205
    %2207 = vmatmul.bf16.gmra.mxu0 %v980
    %v2208 = vpop.f32.mrf.mxu0
    %v2209 = vadd.f32 %v2120, %v2208
    %v2210 = vpop.f32.mrf.mxu0
    %v2211 = vadd.f32 %v2122, %v2210
    %2212 = vdwg.mxu0
    %v2213 = vlaneseq
    %v2214 = vand.u32 %v2213, 127
    %vm2215 = vcmp.ge.s32.totalorder %v2214, 64
    %vm2216 = vcmp.lt.s32.totalorder %v2214, 96
    %vm2217 = vmand %vm2215, %vm2216
    %v2218 = vsel %vm2217, %v2134, 0.0
    %v2219 = vsel %vm2217, %v2136, 0.0
    %v2220 = vsel %vm2217, %v2139, 0.0
    %v2221 = vsel %vm2217, %v2141, 0.0
    %v2222 = vsel %vm2217, %v2144, 0.0
    %v2223 = vsel %vm2217, %v2146, 0.0
    %v2224 = vsel %vm2217, %v2149, 0.0
    %v2225 = vsel %vm2217, %v2151, 0.0
    %v2226 = vsel %vm2217, %v2154, 0.0
    %v2227 = vsel %vm2217, %v2156, 0.0
    %v2228 = vsel %vm2217, %v2159, 0.0
    %v2229 = vsel %vm2217, %v2161, 0.0
    %v2230 = vsel %vm2217, %v2164, 0.0
    %v2231 = vsel %vm2217, %v2166, 0.0
    %v2232 = vsel %vm2217, %v2169, 0.0
    %v2233 = vsel %vm2217, %v2171, 0.0
    %v2234 = vsel %vm2217, %v2174, 0.0
    %v2235 = vsel %vm2217, %v2176, 0.0
    %v2236 = vsel %vm2217, %v2179, 0.0
    %v2237 = vsel %vm2217, %v2181, 0.0
    %v2238 = vsel %vm2217, %v2184, 0.0
    %v2239 = vsel %vm2217, %v2186, 0.0
    %v2240 = vsel %vm2217, %v2189, 0.0
    %v2241 = vsel %vm2217, %v2191, 0.0
    %v2242 = vsel %vm2217, %v2194, 0.0
    %v2243 = vsel %vm2217, %v2196, 0.0
    %v2244 = vsel %vm2217, %v2199, 0.0
    %v2245 = vsel %vm2217, %v2201, 0.0
    %v2246 = vsel %vm2217, %v2204, 0.0
    %v2247 = vsel %vm2217, %v2206, 0.0
    %v2248 = vsel %vm2217, %v2209, 0.0
    %v2249 = vsel %vm2217, %v2211, 0.0
    %v2250 = vunpack.c.l.bf16 %v103
    %v2251 = vunpack.c.l.bf16 %v104
    %v2252 = vunpack.c.l.bf16 %v105
    %v2253 = vunpack.c.l.bf16 %v106
    %v2254 = vunpack.c.l.bf16 %v107
    %v2255 = vunpack.c.l.bf16 %v108
    %v2256 = vunpack.c.l.bf16 %v109
    %v2257 = vunpack.c.l.bf16 %v110
    %v2258 = vunpack.c.l.bf16 %v111
    %v2259 = vunpack.c.l.bf16 %v112
    %v2260 = vunpack.c.l.bf16 %v113
    %v2261 = vunpack.c.l.bf16 %v114
    %v2262 = vunpack.c.l.bf16 %v115
    %v2263 = vunpack.c.l.bf16 %v116
    %v2264 = vunpack.c.l.bf16 %v117
    %v2265 = vunpack.c.l.bf16 %v118
    %v2266 = vunpack.c.l.bf16 %v119
    %v2267 = vunpack.c.l.bf16 %v120
    %v2268 = vunpack.c.l.bf16 %v121
    %v2269 = vunpack.c.l.bf16 %v122
    %v2270 = vunpack.c.l.bf16 %v123
    %v2271 = vunpack.c.l.bf16 %v124
    %v2272 = vunpack.c.l.bf16 %v125
    %v2273 = vunpack.c.l.bf16 %v126
    %v2274 = vunpack.c.l.bf16 %v127
    %v2275 = vunpack.c.l.bf16 %v128
    %v2276 = vunpack.c.l.bf16 %v129
    %v2277 = vunpack.c.l.bf16 %v130
    %v2278 = vunpack.c.l.bf16 %v131
    %v2279 = vunpack.c.l.bf16 %v132
    %v2280 = vunpack.c.l.bf16 %v133
    %v2281 = vunpack.c.l.bf16 %v134
    %v2282 = vmul.f32 %v2218, 0.5
    %v2283 = vmul.f32 %v2219, 0.5
    %v2284 = vmul.f32 %v2220, 0.5
    %v2285 = vmul.f32 %v2221, 0.5
    %v2286 = vmul.f32 %v2222, 0.5
    %v2287 = vmul.f32 %v2223, 0.5
    %v2288 = vmul.f32 %v2224, 0.5
    %v2289 = vmul.f32 %v2225, 0.5
    %v2290 = vmul.f32 %v2226, 0.5
    %v2291 = vmul.f32 %v2227, 0.5
    %v2292 = vmul.f32 %v2228, 0.5
    %v2293 = vmul.f32 %v2229, 0.5
    %v2294 = vmul.f32 %v2230, 0.5
    %v2295 = vmul.f32 %v2231, 0.5
    %v2296 = vmul.f32 %v2232, 0.5
    %v2297 = vmul.f32 %v2233, 0.5
    %v2298 = vmul.f32 %v2234, 0.5
    %v2299 = vmul.f32 %v2235, 0.5
    %v2300 = vmul.f32 %v2236, 0.5
    %v2301 = vmul.f32 %v2237, 0.5
    %v2302 = vmul.f32 %v2238, 0.5
    %v2303 = vmul.f32 %v2239, 0.5
    %v2304 = vmul.f32 %v2240, 0.5
    %v2305 = vmul.f32 %v2241, 0.5
    %v2306 = vmul.f32 %v2242, 0.5
    %v2307 = vmul.f32 %v2243, 0.5
    %v2308 = vmul.f32 %v2244, 0.5
    %v2309 = vmul.f32 %v2245, 0.5
    %v2310 = vmul.f32 %v2246, 0.5
    %v2311 = vmul.f32 %v2247, 0.5
    %v2312 = vmul.f32 %v2248, 0.5
    %v2313 = vmul.f32 %v2249, 0.5
    %v2314 = vmul.f32 %v2282, 1.442695
    %v2315 = vpow.pop %v2314
    %v2316 = vmul.f32 %v2283, 1.442695
    %v2317 = vpow.pop %v2316
    %v2318 = vmul.f32 %v2284, 1.442695
    %v2319 = vpow.pop %v2318
    %v2320 = vmul.f32 %v2285, 1.442695
    %v2321 = vpow.pop %v2320
    %v2322 = vmul.f32 %v2286, 1.442695
    %v2323 = vpow.pop %v2322
    %v2324 = vmul.f32 %v2287, 1.442695
    %v2325 = vpow.pop %v2324
    %v2326 = vmul.f32 %v2288, 1.442695
    %v2327 = vpow.pop %v2326
    %v2328 = vmul.f32 %v2289, 1.442695
    %v2329 = vpow.pop %v2328
    %v2330 = vmul.f32 %v2290, 1.442695
    %v2331 = vpow.pop %v2330
    %v2332 = vmul.f32 %v2291, 1.442695
    %v2333 = vpow.pop %v2332
    %v2334 = vmul.f32 %v2292, 1.442695
    %v2335 = vpow.pop %v2334
    %v2336 = vmul.f32 %v2293, 1.442695
    %v2337 = vpow.pop %v2336
    %v2338 = vmul.f32 %v2294, 1.442695
    %v2339 = vpow.pop %v2338
    %v2340 = vmul.f32 %v2295, 1.442695
    %v2341 = vpow.pop %v2340
    %v2342 = vmul.f32 %v2296, 1.442695
    %v2343 = vpow.pop %v2342
    %v2344 = vmul.f32 %v2297, 1.442695
    %v2345 = vpow.pop %v2344
    %v2346 = vmul.f32 %v2298, 1.442695
    %v2347 = vpow.pop %v2346
    %v2348 = vmul.f32 %v2299, 1.442695
    %v2349 = vpow.pop %v2348
    %v2350 = vmul.f32 %v2300, 1.442695
    %v2351 = vpow.pop %v2350
    %v2352 = vmul.f32 %v2301, 1.442695
    %v2353 = vpow.pop %v2352
    %v2354 = vmul.f32 %v2302, 1.442695
    %v2355 = vpow.pop %v2354
    %v2356 = vmul.f32 %v2303, 1.442695
    %v2357 = vpow.pop %v2356
    %v2358 = vmul.f32 %v2304, 1.442695
    %v2359 = vpow.pop %v2358
    %v2360 = vmul.f32 %v2305, 1.442695
    %v2361 = vpow.pop %v2360
    %v2362 = vmul.f32 %v2306, 1.442695
    %v2363 = vpow.pop %v2362
    %v2364 = vmul.f32 %v2307, 1.442695
    %v2365 = vpow.pop %v2364
    %v2366 = vmul.f32 %v2308, 1.442695
    %v2367 = vpow.pop %v2366
    %v2368 = vmul.f32 %v2309, 1.442695
    %v2369 = vpow.pop %v2368
    %v2370 = vmul.f32 %v2310, 1.442695
    %v2371 = vpow.pop %v2370
    %v2372 = vmul.f32 %v2311, 1.442695
    %v2373 = vpow.pop %v2372
    %v2374 = vmul.f32 %v2312, 1.442695
    %v2375 = vpow.pop %v2374
    %v2376 = vmul.f32 %v2313, 1.442695
    %v2377 = vpow.pop %v2376
    %v2378 = vmul.f32 %v2250, %v2315
    %v2379 = vmul.f32 %v2251, %v2317
    %v2380 = vmul.f32 %v2252, %v2319
    %v2381 = vmul.f32 %v2253, %v2321
    %v2382 = vmul.f32 %v2254, %v2323
    %v2383 = vmul.f32 %v2255, %v2325
    %v2384 = vmul.f32 %v2256, %v2327
    %v2385 = vmul.f32 %v2257, %v2329
    %v2386 = vmul.f32 %v2258, %v2331
    %v2387 = vmul.f32 %v2259, %v2333
    %v2388 = vmul.f32 %v2260, %v2335
    %v2389 = vmul.f32 %v2261, %v2337
    %v2390 = vmul.f32 %v2262, %v2339
    %v2391 = vmul.f32 %v2263, %v2341
    %v2392 = vmul.f32 %v2264, %v2343
    %v2393 = vmul.f32 %v2265, %v2345
    %v2394 = vmul.f32 %v2266, %v2347
    %v2395 = vmul.f32 %v2267, %v2349
    %v2396 = vmul.f32 %v2268, %v2351
    %v2397 = vmul.f32 %v2269, %v2353
    %v2398 = vmul.f32 %v2270, %v2355
    %v2399 = vmul.f32 %v2271, %v2357
    %v2400 = vmul.f32 %v2272, %v2359
    %v2401 = vmul.f32 %v2273, %v2361
    %v2402 = vmul.f32 %v2274, %v2363
    %v2403 = vmul.f32 %v2275, %v2365
    %v2404 = vmul.f32 %v2276, %v2367
    %v2405 = vmul.f32 %v2277, %v2369
    %v2406 = vmul.f32 %v2278, %v2371
    %v2407 = vmul.f32 %v2279, %v2373
    %v2408 = vmul.f32 %v2280, %v2375
    %v2409 = vmul.f32 %v2281, %v2377
    %v2410 = vsel %vm2217, %v2378, 0.0
    %v2411 = vsel %vm2217, %v2379, 0.0
    %v2412 = vsel %vm2217, %v2380, 0.0
    %v2413 = vsel %vm2217, %v2381, 0.0
    %v2414 = vsel %vm2217, %v2382, 0.0
    %v2415 = vsel %vm2217, %v2383, 0.0
    %v2416 = vsel %vm2217, %v2384, 0.0
    %v2417 = vsel %vm2217, %v2385, 0.0
    %v2418 = vsel %vm2217, %v2386, 0.0
    %v2419 = vsel %vm2217, %v2387, 0.0
    %v2420 = vsel %vm2217, %v2388, 0.0
    %v2421 = vsel %vm2217, %v2389, 0.0
    %v2422 = vsel %vm2217, %v2390, 0.0
    %v2423 = vsel %vm2217, %v2391, 0.0
    %v2424 = vsel %vm2217, %v2392, 0.0
    %v2425 = vsel %vm2217, %v2393, 0.0
    %v2426 = vsel %vm2217, %v2394, 0.0
    %v2427 = vsel %vm2217, %v2395, 0.0
    %v2428 = vsel %vm2217, %v2396, 0.0
    %v2429 = vsel %vm2217, %v2397, 0.0
    %v2430 = vsel %vm2217, %v2398, 0.0
    %v2431 = vsel %vm2217, %v2399, 0.0
    %v2432 = vsel %vm2217, %v2400, 0.0
    %v2433 = vsel %vm2217, %v2401, 0.0
    %v2434 = vsel %vm2217, %v2402, 0.0
    %v2435 = vsel %vm2217, %v2403, 0.0
    %v2436 = vsel %vm2217, %v2404, 0.0
    %v2437 = vsel %vm2217, %v2405, 0.0
    %v2438 = vsel %vm2217, %v2406, 0.0
    %v2439 = vsel %vm2217, %v2407, 0.0
    %v2440 = vsel %vm2217, %v2408, 0.0
    %v2441 = vsel %vm2217, %v2409, 0.0
    %v2442 = vadd.f32 %v1518, %v2410
    %v2443 = vadd.f32 %v1520, %v2411
    %v2444 = vadd.f32 %v1523, %v2412
    %v2445 = vadd.f32 %v1525, %v2413
    %v2446 = vadd.f32 %v1528, %v2414
    %v2447 = vadd.f32 %v1530, %v2415
    %v2448 = vadd.f32 %v1533, %v2416
    %v2449 = vadd.f32 %v1535, %v2417
    %v2450 = vadd.f32 %v1538, %v2418
    %v2451 = vadd.f32 %v1540, %v2419
    %v2452 = vadd.f32 %v1543, %v2420
    %v2453 = vadd.f32 %v1545, %v2421
    %v2454 = vadd.f32 %v1548, %v2422
    %v2455 = vadd.f32 %v1550, %v2423
    %v2456 = vadd.f32 %v1553, %v2424
    %v2457 = vadd.f32 %v1555, %v2425
    %v2458 = vadd.f32 %v1558, %v2426
    %v2459 = vadd.f32 %v1560, %v2427
    %v2460 = vadd.f32 %v1563, %v2428
    %v2461 = vadd.f32 %v1565, %v2429
    %v2462 = vadd.f32 %v1568, %v2430
    %v2463 = vadd.f32 %v1570, %v2431
    %v2464 = vadd.f32 %v1573, %v2432
    %v2465 = vadd.f32 %v1575, %v2433
    %v2466 = vadd.f32 %v1578, %v2434
    %v2467 = vadd.f32 %v1580, %v2435
    %v2468 = vadd.f32 %v1583, %v2436
    %v2469 = vadd.f32 %v1585, %v2437
    %v2470 = vadd.f32 %v1588, %v2438
    %v2471 = vadd.f32 %v1590, %v2439
    %v2472 = vadd.f32 %v1593, %v2440
    %v2473 = vadd.f32 %v1595, %v2441
    %2474 = vst [vmem:[#allocation11] sm:$0xff] %v2442
    %2475 = vst [vmem:[#allocation11 + $0x8] sm:$0xff] %v2443
    %2476 = vst [vmem:[#allocation11 + $0x10] sm:$0xff] %v2444
    %2477 = vst [vmem:[#allocation11 + $0x18] sm:$0xff] %v2445
    %2478 = vst [vmem:[#allocation11 + $0x20] sm:$0xff] %v2446
    %2479 = vst [vmem:[#allocation11 + $0x28] sm:$0xff] %v2447
    %2480 = vst [vmem:[#allocation11 + $0x30] sm:$0xff] %v2448
    %2481 = vst [vmem:[#allocation11 + $0x38] sm:$0xff] %v2449
    %2482 = vst [vmem:[#allocation11 + $0x40] sm:$0xff] %v2450
    %2483 = vst [vmem:[#allocation11 + $0x48] sm:$0xff] %v2451
    %2484 = vst [vmem:[#allocation11 + $0x50] sm:$0xff] %v2452
    %2485 = vst [vmem:[#allocation11 + $0x58] sm:$0xff] %v2453
    %2486 = vst [vmem:[#allocation11 + $0x60] sm:$0xff] %v2454
    %2487 = vst [vmem:[#allocation11 + $0x68] sm:$0xff] %v2455
    %2488 = vst [vmem:[#allocation11 + $0x70] sm:$0xff] %v2456
    %2489 = vst [vmem:[#allocation11 + $0x78] sm:$0xff] %v2457
    %2490 = vst [vmem:[#allocation11 + $0x80] sm:$0xff] %v2458
    %2491 = vst [vmem:[#allocation11 + $0x88] sm:$0xff] %v2459
    %2492 = vst [vmem:[#allocation11 + $0x90] sm:$0xff] %v2460
    %2493 = vst [vmem:[#allocation11 + $0x98] sm:$0xff] %v2461
    %2494 = vst [vmem:[#allocation11 + $0xa0] sm:$0xff] %v2462
    %2495 = vst [vmem:[#allocation11 + $0xa8] sm:$0xff] %v2463
    %2496 = vst [vmem:[#allocation11 + $0xb0] sm:$0xff] %v2464
    %2497 = vst [vmem:[#allocation11 + $0xb8] sm:$0xff] %v2465
    %2498 = vst [vmem:[#allocation11 + $0xc0] sm:$0xff] %v2466
    %2499 = vst [vmem:[#allocation11 + $0xc8] sm:$0xff] %v2467
    %2500 = vst [vmem:[#allocation11 + $0xd0] sm:$0xff] %v2468
    %2501 = vst [vmem:[#allocation11 + $0xd8] sm:$0xff] %v2469
    %2502 = vst [vmem:[#allocation11 + $0xe0] sm:$0xff] %v2470
    %2503 = vst [vmem:[#allocation11 + $0xe8] sm:$0xff] %v2471
    %2504 = vst [vmem:[#allocation11 + $0xf0] sm:$0xff] %v2472
    %2505 = vst [vmem:[#allocation11 + $0xf8] sm:$0xff] %v2473
    // Predicated region
    $region50: #{tpu_custom_call.1} parent=1 // pred_check
      _
    $region51: #{tpu_custom_call.1} parent=1 // pred_check_branch
      %2507 = sbr.rel (0) target = $region53
    $region52: #{tpu_custom_call.1} parent=1 // pred_region
      %2509 = vsyncadd [#allocation4], 0
      %s2510 = sshll.u32 [#allocation11], 4
      %s2511 = int_to_ptr.vmem [resolvable:$true] %s2510
      %s2512 = sshll.u32 %s7, 4
      %s2513 = int_to_ptr.hbm [resolvable:$true] %s2512
      %2518 = dma.vmem_to_hbm [thread:$0]  %s2511, 4096, %s2513, [#allocation4], 128, 128, 8
    $region53: #{tpu_custom_call.1} parent=1 // pred_fallthru
      _
    // Predicated region
    $region54: #{tpu_custom_call.1} parent=1 // pred_check
      _
    $region55: #{tpu_custom_call.1} parent=1 // pred_check_branch
      %2520 = sbr.rel (0) target = $region57
    $region56: #{tpu_custom_call.1} parent=1 // pred_region
      %2522 = dma.done [#allocation4], 4096
    $region57: #{tpu_custom_call.1} parent=1 // pred_fallthru
      _
    %2523 = vsyncpa [#allocation3], 1
    %2524 = vsyncpa [#allocation6], 1
    %2525 = vsyncpa [#allocation9], 1
    %2526 = vsyncpa [#allocation4], 1

</llo_original>
